<compile_context>
chip_gen: v6e
topology: v6e:2x2x1
jax: 0.10.0
libtpu: 0.0.40
codegen_flags: <defaults>
</compile_context>

<pallas_src>
import jax
import jax.numpy as jnp
from jax import lax
from jax.experimental import pallas as pl
from jax.experimental.pallas import tpu as pltpu  # noqa: F401  (TPU backend)


# ----------------------------------------------------------------------------
# Fused Pallas kernel:
#   embedding gather + 4 x (SAGEConv 'mean' + PReLU + LayerNorm) + mean_nodes
# ----------------------------------------------------------------------------
def gcn_fused_kernel(idx_ref, adj_ref, emb_ref, w1s_ref, w1n_ref, ws_ref,
                     wn_ref, b_ref, alpha_ref, gamma_ref, beta_ref, out_ref):
    """out[:, l*H:(l+1)*H] = mean_nodes(h_{l+1}) with
       h_{l+1} = LayerNorm(PReLU(h_l @ Ws_l + (adj @ h_l) @ Wn_l + b_l))."""
    n = adj_ref.shape[0]
    vocab = emb_ref.shape[0]
    n_layers, h_feats = b_ref.shape
    inv_n = 1.0 / n                                   # static constant

    # ---- fused embedding lookup: one_hot(idx) @ emb on the MXU (f32) -------
    idx = idx_ref[...]                                              # (N, 1) i32
    iota = lax.broadcasted_iota(jnp.int32, (n, vocab), 1)           # (N, V)
    onehot = (iota == idx).astype(jnp.float32)                      # (N, V)
    h = jnp.dot(onehot, emb_ref[...],
                preferred_element_type=jnp.float32)                 # (N, EMB)

    adj = adj_ref[...]                                              # (N, N) f32

    # small per-layer vectors, loaded once (hoisted)
    b_all = b_ref[...]                                              # (L, H)
    a_all = alpha_ref[...]
    g_all = gamma_ref[...]
    be_all = beta_ref[...]

    for l in range(n_layers):                     # unrolled at trace time (L=4)
        # DGL SAGEConv 'mean' neighbor aggregation (MXU, f32)
        neigh = jnp.dot(adj, h, preferred_element_type=jnp.float32)  # (N, D)

        # self + neighbor projections as two f32 MXU dots (no lane concat)
        if l == 0:
            ws_l = w1s_ref[...]                                      # (EMB, H)
            wn_l = w1n_ref[...]
        else:
            ws_l = ws_ref[l - 1]                                     # (H, H)
            wn_l = wn_ref[l - 1]
        z = (jnp.dot(h, ws_l, preferred_element_type=jnp.float32)
             + jnp.dot(neigh, wn_l, preferred_element_type=jnp.float32))
        z = z + b_all[l:l + 1, :]                                    # (N, H)

        # PReLU with per-channel alpha
        z = jnp.where(z >= 0.0, z, a_all[l:l + 1, :] * z)

        # LayerNorm over feature dim, eps = 1e-5 (PyTorch default)
        mu = jnp.mean(z, axis=-1, keepdims=True)
        var = jnp.mean(jnp.square(z - mu), axis=-1, keepdims=True)
        hn = ((z - mu) * lax.rsqrt(var + 1e-5)
              * g_all[l:l + 1, :] + be_all[l:l + 1, :])              # (N, H)

        # incremental readout: per-layer node-mean written into the output slab
        out_ref[:, l * h_feats:(l + 1) * h_feats] = (
            jnp.sum(hn, axis=0, keepdims=True) * inv_n)

        h = hn                                     # next layer's input (f32)


# ----------------------------------------------------------------------------
# Wrappers
# ----------------------------------------------------------------------------
def _vmem_full(shape):
    # whole-array block resident in VMEM (no grid)
    return pl.BlockSpec(shape, lambda: (0,) * len(shape))


def init_gcn_params(key, embedding_size, h_feats):
    """Deterministic synthetic parameters (shapes match the PyTorch module)."""
    keys = jax.random.split(key, 16)
    params = {}
    params["embedding"] = jax.random.normal(
        keys[0], (256 + 1, embedding_size), jnp.float32) * 0.1

    dims_in = [embedding_size, h_feats, h_feats, h_feats]
    for i, d_in in enumerate(dims_in):
        scale = 1.0 / jnp.sqrt(jnp.float32(d_in))
        params[f"gcn{i + 1}"] = {
            "w_self": jax.random.uniform(
                keys[1 + 3 * i], (d_in, h_feats), jnp.float32, -scale, scale),
            "w_neigh": jax.random.uniform(
                keys[2 + 3 * i], (d_in, h_feats), jnp.float32, -scale, scale),
            "bias": jnp.zeros((h_feats,), jnp.float32),
            "prelu_alpha": jnp.full((h_feats,), 0.25, jnp.float32),  # PReLU default
            "ln_gamma": jnp.ones((h_feats,), jnp.float32),           # LN default
            "ln_beta": jnp.zeros((h_feats,), jnp.float32),
        }
    return params


def pack_gcn_params(params, embedding_size, h_feats):
    """One-time host-side packing (hoisted out of the forward pass)."""
    emb = params["embedding"].astype(jnp.float32)           # (257, EMB)
    vocab = emb.shape[0]
    vocab_pad = ((vocab + 127) // 128) * 128                # sublane/lane friendly
    if vocab_pad > vocab:
        emb = jnp.concatenate(
            [emb, jnp.zeros((vocab_pad - vocab, emb.shape[1]), emb.dtype)], axis=0)

    ws_rest = jnp.stack([params[f"gcn{i}"]["w_self"] for i in range(2, 5)])
    wn_rest = jnp.stack([params[f"gcn{i}"]["w_neigh"] for i in range(2, 5)])
    return {
        "emb": emb,                                                  # (Vp, EMB) f32
        "w1s": params["gcn1"]["w_self"].astype(jnp.float32),         # (EMB, H)
        "w1n": params["gcn1"]["w_neigh"].astype(jnp.float32),        # (EMB, H)
        "ws": ws_rest.astype(jnp.float32),                           # (3, H, H)
        "wn": wn_rest.astype(jnp.float32),                           # (3, H, H)
        "b": jnp.stack([params[f"gcn{i}"]["bias"] for i in range(1, 5)]),
        "alpha": jnp.stack([params[f"gcn{i}"]["prelu_alpha"] for i in range(1, 5)]),
        "gamma": jnp.stack([params[f"gcn{i}"]["ln_gamma"] for i in range(1, 5)]),
        "beta": jnp.stack([params[f"gcn{i}"]["ln_beta"] for i in range(1, 5)]),
    }


@jax.jit
def gcn_forward(packed, adj, in_feat):
    """in_feat: (N,) int tokens in [0, 256]; adj: (N, N) row-normalized dense f32."""
    n = adj.shape[0]
    emb = packed["emb"]
    h_feats = packed["b"].shape[1]
    n_layers = packed["b"].shape[0]
    out_w = n_layers * h_feats

    idx = in_feat.astype(jnp.int32).reshape(n, 1)            # tiny (N,1) i32

    args = (idx, adj.astype(jnp.float32), emb,
            packed["w1s"], packed["w1n"], packed["ws"], packed["wn"],
            packed["b"], packed["alpha"], packed["gamma"], packed["beta"])

    # advisory cost estimate so XLA schedules the custom call sensibly
    emb_dim = emb.shape[1]
    flops = 2 * n * emb.shape[0] * emb_dim                   # one-hot gather matmul
    for d in [emb_dim] + [h_feats] * (n_layers - 1):
        flops += 2 * n * n * d                               # adj @ h
        flops += 2 * 2 * n * d * h_feats                     # two projections
        flops += 10 * n * h_feats                            # PReLU + LN elementwise
    bytes_accessed = sum(int(a.size) * a.dtype.itemsize for a in args) + 4 * out_w
    cost = pl.CostEstimate(flops=int(flops),
                           transcendentals=int(n_layers * n),  # rsqrt per node/layer
                           bytes_accessed=int(bytes_accessed))

    return pl.pallas_call(
        gcn_fused_kernel,
        out_shape=jax.ShapeDtypeStruct((1, out_w), jnp.float32),
        in_specs=[_vmem_full(a.shape) for a in args],
        out_specs=_vmem_full((1, out_w)),
        cost_estimate=cost,
    )(*args)


# ----------------------------------------------------------------------------
# Main
# ----------------------------------------------------------------------------
if __name__ == "__main__":
    N = 16            # number of nodes in the (single) graph
    EMB = 32          # embedding_size
    H = 32            # h_feats

    key = jax.random.PRNGKey(0)
    k_param, k_feat, k_adj = jax.random.split(key, 3)

    params = init_gcn_params(k_param, EMB, H)
    packed = pack_gcn_params(params, EMB, H)

    # node features: integer tokens in [0, 256]
    in_feat = jax.random.randint(k_feat, (N,), 0, 257, dtype=jnp.int32)

    # deterministic random graph -> dense row-normalized adjacency (no self loops)
    # built once outside the jitted forward (static graph => hoisted preprocessing)
    a = (jax.random.uniform(k_adj, (N, N)) < 0.3).astype(jnp.float32)
    a = a * (1.0 - jnp.eye(N, dtype=jnp.float32))
    deg = jnp.sum(a, axis=1, keepdims=True)
    adj = a / jnp.maximum(deg, 1.0)   # isolated nodes -> zero row (mean of no msgs = 0)

    g_vec = gcn_forward(packed, adj, in_feat)
    g_vec = jax.block_until_ready(g_vec)

    assert g_vec.shape == (1, 4 * H)
    assert bool(jnp.all(jnp.isfinite(g_vec)))
    print("KERNEL_OK")
</pallas_src>

<mosaic_0001>
module attributes {stable_mosaic.version = 11 : i64} {
  func.func @gcn_fused_kernel(%arg0: memref<16x1xi32, #tpu.memory_space<vmem>>, %arg1: memref<16x16xf32, #tpu.memory_space<vmem>>, %arg2: memref<384x32xf32, #tpu.memory_space<vmem>>, %arg3: memref<32x32xf32, #tpu.memory_space<vmem>>, %arg4: memref<32x32xf32, #tpu.memory_space<vmem>>, %arg5: memref<3x32x32xf32, #tpu.memory_space<vmem>>, %arg6: memref<3x32x32xf32, #tpu.memory_space<vmem>>, %arg7: memref<4x32xf32, #tpu.memory_space<vmem>>, %arg8: memref<4x32xf32, #tpu.memory_space<vmem>>, %arg9: memref<4x32xf32, #tpu.memory_space<vmem>>, %arg10: memref<4x32xf32, #tpu.memory_space<vmem>>, %arg11: memref<1x128xf32, #tpu.memory_space<vmem>>) attributes {dimension_semantics = [], scalar_prefetch = 0 : i64, scratch_operands = 0 : i64, tpu.core_type = #tpu.core_type<tc>} {
    %c0 = arith.constant 0 : index
    %c0_0 = arith.constant 0 : index
    %0 = vector.load %arg0[%c0, %c0_0] : memref<16x1xi32, #tpu.memory_space<vmem>>, vector<16x1xi32>
    %1 = tpu.iota {dimensions = array<i32: 1>} : vector<16x384xi32>
    %2 = vector.broadcast %0 : vector<16x1xi32> to vector<16x384xi32>
    %3 = arith.cmpi eq, %1, %2 : vector<16x384xi32>
    %4 = arith.extui %3 : vector<16x384xi1> to vector<16x384xi32>
    %5 = arith.sitofp %4 : vector<16x384xi32> to vector<16x384xf32>
    %c0_1 = arith.constant 0 : index
    %c0_2 = arith.constant 0 : index
    %6 = vector.load %arg2[%c0_1, %c0_2] : memref<384x32xf32, #tpu.memory_space<vmem>>, vector<384x32xf32>
    %cst = arith.constant dense<0.000000e+00> : vector<16x32xf32>
    %7 = tpu.matmul %5, %6, %cst {dimension_numbers = #tpu.dot_dimension_numbers<[1], [0], [0], [1], [0, 0, 1, 1], [], []>} : vector<16x384xf32>, vector<384x32xf32>, vector<16x32xf32> -> vector<16x32xf32>
    %c0_3 = arith.constant 0 : index
    %c0_4 = arith.constant 0 : index
    %8 = vector.load %arg1[%c0_3, %c0_4] : memref<16x16xf32, #tpu.memory_space<vmem>>, vector<16x16xf32>
    %c0_5 = arith.constant 0 : index
    %c0_6 = arith.constant 0 : index
    %9 = vector.load %arg7[%c0_5, %c0_6] : memref<4x32xf32, #tpu.memory_space<vmem>>, vector<4x32xf32>
    %c0_7 = arith.constant 0 : index
    %c0_8 = arith.constant 0 : index
    %10 = vector.load %arg8[%c0_7, %c0_8] : memref<4x32xf32, #tpu.memory_space<vmem>>, vector<4x32xf32>
    %c0_9 = arith.constant 0 : index
    %c0_10 = arith.constant 0 : index
    %11 = vector.load %arg9[%c0_9, %c0_10] : memref<4x32xf32, #tpu.memory_space<vmem>>, vector<4x32xf32>
    %c0_11 = arith.constant 0 : index
    %c0_12 = arith.constant 0 : index
    %12 = vector.load %arg10[%c0_11, %c0_12] : memref<4x32xf32, #tpu.memory_space<vmem>>, vector<4x32xf32>
    %cst_13 = arith.constant dense<0.000000e+00> : vector<16x32xf32>
    %13 = tpu.matmul %8, %7, %cst_13 {dimension_numbers = #tpu.dot_dimension_numbers<[1], [0], [0], [1], [0, 0, 1, 1], [], []>} : vector<16x16xf32>, vector<16x32xf32>, vector<16x32xf32> -> vector<16x32xf32>
    %c0_14 = arith.constant 0 : index
    %c0_15 = arith.constant 0 : index
    %14 = vector.load %arg3[%c0_14, %c0_15] : memref<32x32xf32, #tpu.memory_space<vmem>>, vector<32x32xf32>
    %c0_16 = arith.constant 0 : index
    %c0_17 = arith.constant 0 : index
    %15 = vector.load %arg4[%c0_16, %c0_17] : memref<32x32xf32, #tpu.memory_space<vmem>>, vector<32x32xf32>
    %cst_18 = arith.constant dense<0.000000e+00> : vector<16x32xf32>
    %16 = tpu.matmul %7, %14, %cst_18 {dimension_numbers = #tpu.dot_dimension_numbers<[1], [0], [0], [1], [0, 0, 1, 1], [], []>} : vector<16x32xf32>, vector<32x32xf32>, vector<16x32xf32> -> vector<16x32xf32>
    %cst_19 = arith.constant dense<0.000000e+00> : vector<16x32xf32>
    %17 = tpu.matmul %13, %15, %cst_19 {dimension_numbers = #tpu.dot_dimension_numbers<[1], [0], [0], [1], [0, 0, 1, 1], [], []>} : vector<16x32xf32>, vector<32x32xf32>, vector<16x32xf32> -> vector<16x32xf32>
    %18 = arith.addf %16, %17 : vector<16x32xf32>
    %19 = vector.extract_strided_slice %9 {offsets = [0, 0], sizes = [1, 32], strides = [1, 1]} : vector<4x32xf32> to vector<1x32xf32>
    %20 = vector.broadcast %19 : vector<1x32xf32> to vector<16x32xf32>
    %21 = arith.addf %18, %20 : vector<16x32xf32>
    %cst_20 = arith.constant 0.000000e+00 : f32
    %22 = vector.broadcast %cst_20 : f32 to vector<16x32xf32>
    %23 = arith.cmpf oge, %21, %22 : vector<16x32xf32>
    %24 = vector.extract_strided_slice %10 {offsets = [0, 0], sizes = [1, 32], strides = [1, 1]} : vector<4x32xf32> to vector<1x32xf32>
    %25 = vector.broadcast %24 : vector<1x32xf32> to vector<16x32xf32>
    %26 = arith.mulf %25, %21 : vector<16x32xf32>
    %27 = arith.select %23, %21, %26 : vector<16x32xi1>, vector<16x32xf32>
    %cst_21 = arith.constant dense<0.000000e+00> : vector<16xf32>
    %28 = vector.multi_reduction <add>, %27, %cst_21 [1] : vector<16x32xf32> to vector<16xf32>
    %29 = vector.shape_cast %28 : vector<16xf32> to vector<16x1xf32>
    %cst_22 = arith.constant 3.200000e+01 : f32
    %30 = vector.broadcast %cst_22 : f32 to vector<16x1xf32>
    %31 = arith.divf %29, %30 : vector<16x1xf32>
    %32 = vector.broadcast %31 : vector<16x1xf32> to vector<16x32xf32>
    %33 = arith.subf %27, %32 : vector<16x32xf32>
    %34 = arith.mulf %33, %33 : vector<16x32xf32>
    %cst_23 = arith.constant dense<0.000000e+00> : vector<16xf32>
    %35 = vector.multi_reduction <add>, %34, %cst_23 [1] : vector<16x32xf32> to vector<16xf32>
    %36 = vector.shape_cast %35 : vector<16xf32> to vector<16x1xf32>
    %cst_24 = arith.constant 3.200000e+01 : f32
    %37 = vector.broadcast %cst_24 : f32 to vector<16x1xf32>
    %38 = arith.divf %36, %37 : vector<16x1xf32>
    %39 = vector.broadcast %31 : vector<16x1xf32> to vector<16x32xf32>
    %40 = arith.subf %27, %39 : vector<16x32xf32>
    %cst_25 = arith.constant 9.99999974E-6 : f32
    %41 = vector.broadcast %cst_25 : f32 to vector<16x1xf32>
    %42 = arith.addf %38, %41 : vector<16x1xf32>
    %43 = math.rsqrt %42 : vector<16x1xf32>
    %44 = vector.broadcast %43 : vector<16x1xf32> to vector<16x32xf32>
    %45 = arith.mulf %40, %44 : vector<16x32xf32>
    %46 = vector.extract_strided_slice %11 {offsets = [0, 0], sizes = [1, 32], strides = [1, 1]} : vector<4x32xf32> to vector<1x32xf32>
    %47 = vector.broadcast %46 : vector<1x32xf32> to vector<16x32xf32>
    %48 = arith.mulf %45, %47 : vector<16x32xf32>
    %49 = vector.extract_strided_slice %12 {offsets = [0, 0], sizes = [1, 32], strides = [1, 1]} : vector<4x32xf32> to vector<1x32xf32>
    %50 = vector.broadcast %49 : vector<1x32xf32> to vector<16x32xf32>
    %51 = arith.addf %48, %50 : vector<16x32xf32>
    %cst_26 = arith.constant dense<0.000000e+00> : vector<32xf32>
    %52 = vector.multi_reduction <add>, %51, %cst_26 [0] : vector<16x32xf32> to vector<32xf32>
    %53 = vector.shape_cast %52 : vector<32xf32> to vector<1x32xf32>
    %cst_27 = arith.constant 6.250000e-02 : f32
    %54 = vector.broadcast %cst_27 : f32 to vector<1x32xf32>
    %55 = arith.mulf %53, %54 : vector<1x32xf32>
    %c0_28 = arith.constant 0 : index
    %c0_29 = arith.constant 0 : index
    %56 = vector.load %arg11[%c0_28, %c0_29] : memref<1x128xf32, #tpu.memory_space<vmem>>, vector<1x32xf32>
    tpu.vector_store %arg11[%c0_28, %c0_29], %55 {strides = array<i32>} : memref<1x128xf32, #tpu.memory_space<vmem>>, vector<1x32xf32>,
    %cst_30 = arith.constant dense<0.000000e+00> : vector<16x32xf32>
    %57 = tpu.matmul %8, %51, %cst_30 {dimension_numbers = #tpu.dot_dimension_numbers<[1], [0], [0], [1], [0, 0, 1, 1], [], []>} : vector<16x16xf32>, vector<16x32xf32>, vector<16x32xf32> -> vector<16x32xf32>
    %c0_31 = arith.constant 0 : index
    %c0_32 = arith.constant 0 : index
    %c0_33 = arith.constant 0 : index
    %58 = vector.load %arg5[%c0_31, %c0_32, %c0_33] : memref<3x32x32xf32, #tpu.memory_space<vmem>>, vector<1x32x32xf32>
    %59 = vector.shape_cast %58 : vector<1x32x32xf32> to vector<32x32xf32>
    %c0_34 = arith.constant 0 : index
    %c0_35 = arith.constant 0 : index
    %c0_36 = arith.constant 0 : index
    %60 = vector.load %arg6[%c0_34, %c0_35, %c0_36] : memref<3x32x32xf32, #tpu.memory_space<vmem>>, vector<1x32x32xf32>
    %61 = vector.shape_cast %60 : vector<1x32x32xf32> to vector<32x32xf32>
    %cst_37 = arith.constant dense<0.000000e+00> : vector<16x32xf32>
    %62 = tpu.matmul %51, %59, %cst_37 {dimension_numbers = #tpu.dot_dimension_numbers<[1], [0], [0], [1], [0, 0, 1, 1], [], []>} : vector<16x32xf32>, vector<32x32xf32>, vector<16x32xf32> -> vector<16x32xf32>
    %cst_38 = arith.constant dense<0.000000e+00> : vector<16x32xf32>
    %63 = tpu.matmul %57, %61, %cst_38 {dimension_numbers = #tpu.dot_dimension_numbers<[1], [0], [0], [1], [0, 0, 1, 1], [], []>} : vector<16x32xf32>, vector<32x32xf32>, vector<16x32xf32> -> vector<16x32xf32>
    %64 = arith.addf %62, %63 : vector<16x32xf32>
    %65 = vector.extract_strided_slice %9 {offsets = [1, 0], sizes = [1, 32], strides = [1, 1]} : vector<4x32xf32> to vector<1x32xf32>
    %66 = vector.broadcast %65 : vector<1x32xf32> to vector<16x32xf32>
    %67 = arith.addf %64, %66 : vector<16x32xf32>
    %cst_39 = arith.constant 0.000000e+00 : f32
    %68 = vector.broadcast %cst_39 : f32 to vector<16x32xf32>
    %69 = arith.cmpf oge, %67, %68 : vector<16x32xf32>
    %70 = vector.extract_strided_slice %10 {offsets = [1, 0], sizes = [1, 32], strides = [1, 1]} : vector<4x32xf32> to vector<1x32xf32>
    %71 = vector.broadcast %70 : vector<1x32xf32> to vector<16x32xf32>
    %72 = arith.mulf %71, %67 : vector<16x32xf32>
    %73 = arith.select %69, %67, %72 : vector<16x32xi1>, vector<16x32xf32>
    %cst_40 = arith.constant dense<0.000000e+00> : vector<16xf32>
    %74 = vector.multi_reduction <add>, %73, %cst_40 [1] : vector<16x32xf32> to vector<16xf32>
    %75 = vector.shape_cast %74 : vector<16xf32> to vector<16x1xf32>
    %cst_41 = arith.constant 3.200000e+01 : f32
    %76 = vector.broadcast %cst_41 : f32 to vector<16x1xf32>
    %77 = arith.divf %75, %76 : vector<16x1xf32>
    %78 = vector.broadcast %77 : vector<16x1xf32> to vector<16x32xf32>
    %79 = arith.subf %73, %78 : vector<16x32xf32>
    %80 = arith.mulf %79, %79 : vector<16x32xf32>
    %cst_42 = arith.constant dense<0.000000e+00> : vector<16xf32>
    %81 = vector.multi_reduction <add>, %80, %cst_42 [1] : vector<16x32xf32> to vector<16xf32>
    %82 = vector.shape_cast %81 : vector<16xf32> to vector<16x1xf32>
    %cst_43 = arith.constant 3.200000e+01 : f32
    %83 = vector.broadcast %cst_43 : f32 to vector<16x1xf32>
    %84 = arith.divf %82, %83 : vector<16x1xf32>
    %85 = vector.broadcast %77 : vector<16x1xf32> to vector<16x32xf32>
    %86 = arith.subf %73, %85 : vector<16x32xf32>
    %cst_44 = arith.constant 9.99999974E-6 : f32
    %87 = vector.broadcast %cst_44 : f32 to vector<16x1xf32>
    %88 = arith.addf %84, %87 : vector<16x1xf32>
    %89 = math.rsqrt %88 : vector<16x1xf32>
    %90 = vector.broadcast %89 : vector<16x1xf32> to vector<16x32xf32>
    %91 = arith.mulf %86, %90 : vector<16x32xf32>
    %92 = vector.extract_strided_slice %11 {offsets = [1, 0], sizes = [1, 32], strides = [1, 1]} : vector<4x32xf32> to vector<1x32xf32>
    %93 = vector.broadcast %92 : vector<1x32xf32> to vector<16x32xf32>
    %94 = arith.mulf %91, %93 : vector<16x32xf32>
    %95 = vector.extract_strided_slice %12 {offsets = [1, 0], sizes = [1, 32], strides = [1, 1]} : vector<4x32xf32> to vector<1x32xf32>
    %96 = vector.broadcast %95 : vector<1x32xf32> to vector<16x32xf32>
    %97 = arith.addf %94, %96 : vector<16x32xf32>
    %cst_45 = arith.constant dense<0.000000e+00> : vector<32xf32>
    %98 = vector.multi_reduction <add>, %97, %cst_45 [0] : vector<16x32xf32> to vector<32xf32>
    %99 = vector.shape_cast %98 : vector<32xf32> to vector<1x32xf32>
    %cst_46 = arith.constant 6.250000e-02 : f32
    %100 = vector.broadcast %cst_46 : f32 to vector<1x32xf32>
    %101 = arith.mulf %99, %100 : vector<1x32xf32>
    %c0_47 = arith.constant 0 : index
    %c32 = arith.constant 32 : index
    %102 = vector.load %arg11[%c0_47, %c32] : memref<1x128xf32, #tpu.memory_space<vmem>>, vector<1x32xf32>
    tpu.vector_store %arg11[%c0_47, %c32], %101 {strides = array<i32>} : memref<1x128xf32, #tpu.memory_space<vmem>>, vector<1x32xf32>,
    %cst_48 = arith.constant dense<0.000000e+00> : vector<16x32xf32>
    %103 = tpu.matmul %8, %97, %cst_48 {dimension_numbers = #tpu.dot_dimension_numbers<[1], [0], [0], [1], [0, 0, 1, 1], [], []>} : vector<16x16xf32>, vector<16x32xf32>, vector<16x32xf32> -> vector<16x32xf32>
    %c1 = arith.constant 1 : index
    %c0_49 = arith.constant 0 : index
    %c0_50 = arith.constant 0 : index
    %104 = vector.load %arg5[%c1, %c0_49, %c0_50] : memref<3x32x32xf32, #tpu.memory_space<vmem>>, vector<1x32x32xf32>
    %105 = vector.shape_cast %104 : vector<1x32x32xf32> to vector<32x32xf32>
    %c1_51 = arith.constant 1 : index
    %c0_52 = arith.constant 0 : index
    %c0_53 = arith.constant 0 : index
    %106 = vector.load %arg6[%c1_51, %c0_52, %c0_53] : memref<3x32x32xf32, #tpu.memory_space<vmem>>, vector<1x32x32xf32>
    %107 = vector.shape_cast %106 : vector<1x32x32xf32> to vector<32x32xf32>
    %cst_54 = arith.constant dense<0.000000e+00> : vector<16x32xf32>
    %108 = tpu.matmul %97, %105, %cst_54 {dimension_numbers = #tpu.dot_dimension_numbers<[1], [0], [0], [1], [0, 0, 1, 1], [], []>} : vector<16x32xf32>, vector<32x32xf32>, vector<16x32xf32> -> vector<16x32xf32>
    %cst_55 = arith.constant dense<0.000000e+00> : vector<16x32xf32>
    %109 = tpu.matmul %103, %107, %cst_55 {dimension_numbers = #tpu.dot_dimension_numbers<[1], [0], [0], [1], [0, 0, 1, 1], [], []>} : vector<16x32xf32>, vector<32x32xf32>, vector<16x32xf32> -> vector<16x32xf32>
    %110 = arith.addf %108, %109 : vector<16x32xf32>
    %111 = vector.extract_strided_slice %9 {offsets = [2, 0], sizes = [1, 32], strides = [1, 1]} : vector<4x32xf32> to vector<1x32xf32>
    %112 = vector.broadcast %111 : vector<1x32xf32> to vector<16x32xf32>
    %113 = arith.addf %110, %112 : vector<16x32xf32>
    %cst_56 = arith.constant 0.000000e+00 : f32
    %114 = vector.broadcast %cst_56 : f32 to vector<16x32xf32>
    %115 = arith.cmpf oge, %113, %114 : vector<16x32xf32>
    %116 = vector.extract_strided_slice %10 {offsets = [2, 0], sizes = [1, 32], strides = [1, 1]} : vector<4x32xf32> to vector<1x32xf32>
    %117 = vector.broadcast %116 : vector<1x32xf32> to vector<16x32xf32>
    %118 = arith.mulf %117, %113 : vector<16x32xf32>
    %119 = arith.select %115, %113, %118 : vector<16x32xi1>, vector<16x32xf32>
    %cst_57 = arith.constant dense<0.000000e+00> : vector<16xf32>
    %120 = vector.multi_reduction <add>, %119, %cst_57 [1] : vector<16x32xf32> to vector<16xf32>
    %121 = vector.shape_cast %120 : vector<16xf32> to vector<16x1xf32>
    %cst_58 = arith.constant 3.200000e+01 : f32
    %122 = vector.broadcast %cst_58 : f32 to vector<16x1xf32>
    %123 = arith.divf %121, %122 : vector<16x1xf32>
    %124 = vector.broadcast %123 : vector<16x1xf32> to vector<16x32xf32>
    %125 = arith.subf %119, %124 : vector<16x32xf32>
    %126 = arith.mulf %125, %125 : vector<16x32xf32>
    %cst_59 = arith.constant dense<0.000000e+00> : vector<16xf32>
    %127 = vector.multi_reduction <add>, %126, %cst_59 [1] : vector<16x32xf32> to vector<16xf32>
    %128 = vector.shape_cast %127 : vector<16xf32> to vector<16x1xf32>
    %cst_60 = arith.constant 3.200000e+01 : f32
    %129 = vector.broadcast %cst_60 : f32 to vector<16x1xf32>
    %130 = arith.divf %128, %129 : vector<16x1xf32>
    %131 = vector.broadcast %123 : vector<16x1xf32> to vector<16x32xf32>
    %132 = arith.subf %119, %131 : vector<16x32xf32>
    %cst_61 = arith.constant 9.99999974E-6 : f32
    %133 = vector.broadcast %cst_61 : f32 to vector<16x1xf32>
    %134 = arith.addf %130, %133 : vector<16x1xf32>
    %135 = math.rsqrt %134 : vector<16x1xf32>
    %136 = vector.broadcast %135 : vector<16x1xf32> to vector<16x32xf32>
    %137 = arith.mulf %132, %136 : vector<16x32xf32>
    %138 = vector.extract_strided_slice %11 {offsets = [2, 0], sizes = [1, 32], strides = [1, 1]} : vector<4x32xf32> to vector<1x32xf32>
    %139 = vector.broadcast %138 : vector<1x32xf32> to vector<16x32xf32>
    %140 = arith.mulf %137, %139 : vector<16x32xf32>
    %141 = vector.extract_strided_slice %12 {offsets = [2, 0], sizes = [1, 32], strides = [1, 1]} : vector<4x32xf32> to vector<1x32xf32>
    %142 = vector.broadcast %141 : vector<1x32xf32> to vector<16x32xf32>
    %143 = arith.addf %140, %142 : vector<16x32xf32>
    %cst_62 = arith.constant dense<0.000000e+00> : vector<32xf32>
    %144 = vector.multi_reduction <add>, %143, %cst_62 [0] : vector<16x32xf32> to vector<32xf32>
    %145 = vector.shape_cast %144 : vector<32xf32> to vector<1x32xf32>
    %cst_63 = arith.constant 6.250000e-02 : f32
    %146 = vector.broadcast %cst_63 : f32 to vector<1x32xf32>
    %147 = arith.mulf %145, %146 : vector<1x32xf32>
    %c0_64 = arith.constant 0 : index
    %c64 = arith.constant 64 : index
    %148 = vector.load %arg11[%c0_64, %c64] : memref<1x128xf32, #tpu.memory_space<vmem>>, vector<1x32xf32>
    tpu.vector_store %arg11[%c0_64, %c64], %147 {strides = array<i32>} : memref<1x128xf32, #tpu.memory_space<vmem>>, vector<1x32xf32>,
    %cst_65 = arith.constant dense<0.000000e+00> : vector<16x32xf32>
    %149 = tpu.matmul %8, %143, %cst_65 {dimension_numbers = #tpu.dot_dimension_numbers<[1], [0], [0], [1], [0, 0, 1, 1], [], []>} : vector<16x16xf32>, vector<16x32xf32>, vector<16x32xf32> -> vector<16x32xf32>
    %c2 = arith.constant 2 : index
    %c0_66 = arith.constant 0 : index
    %c0_67 = arith.constant 0 : index
    %150 = vector.load %arg5[%c2, %c0_66, %c0_67] : memref<3x32x32xf32, #tpu.memory_space<vmem>>, vector<1x32x32xf32>
    %151 = vector.shape_cast %150 : vector<1x32x32xf32> to vector<32x32xf32>
    %c2_68 = arith.constant 2 : index
    %c0_69 = arith.constant 0 : index
    %c0_70 = arith.constant 0 : index
    %152 = vector.load %arg6[%c2_68, %c0_69, %c0_70] : memref<3x32x32xf32, #tpu.memory_space<vmem>>, vector<1x32x32xf32>
    %153 = vector.shape_cast %152 : vector<1x32x32xf32> to vector<32x32xf32>
    %cst_71 = arith.constant dense<0.000000e+00> : vector<16x32xf32>
    %154 = tpu.matmul %143, %151, %cst_71 {dimension_numbers = #tpu.dot_dimension_numbers<[1], [0], [0], [1], [0, 0, 1, 1], [], []>} : vector<16x32xf32>, vector<32x32xf32>, vector<16x32xf32> -> vector<16x32xf32>
    %cst_72 = arith.constant dense<0.000000e+00> : vector<16x32xf32>
    %155 = tpu.matmul %149, %153, %cst_72 {dimension_numbers = #tpu.dot_dimension_numbers<[1], [0], [0], [1], [0, 0, 1, 1], [], []>} : vector<16x32xf32>, vector<32x32xf32>, vector<16x32xf32> -> vector<16x32xf32>
    %156 = arith.addf %154, %155 : vector<16x32xf32>
    %157 = vector.extract_strided_slice %9 {offsets = [3, 0], sizes = [1, 32], strides = [1, 1]} : vector<4x32xf32> to vector<1x32xf32>
    %158 = vector.broadcast %157 : vector<1x32xf32> to vector<16x32xf32>
    %159 = arith.addf %156, %158 : vector<16x32xf32>
    %cst_73 = arith.constant 0.000000e+00 : f32
    %160 = vector.broadcast %cst_73 : f32 to vector<16x32xf32>
    %161 = arith.cmpf oge, %159, %160 : vector<16x32xf32>
    %162 = vector.extract_strided_slice %10 {offsets = [3, 0], sizes = [1, 32], strides = [1, 1]} : vector<4x32xf32> to vector<1x32xf32>
    %163 = vector.broadcast %162 : vector<1x32xf32> to vector<16x32xf32>
    %164 = arith.mulf %163, %159 : vector<16x32xf32>
    %165 = arith.select %161, %159, %164 : vector<16x32xi1>, vector<16x32xf32>
    %cst_74 = arith.constant dense<0.000000e+00> : vector<16xf32>
    %166 = vector.multi_reduction <add>, %165, %cst_74 [1] : vector<16x32xf32> to vector<16xf32>
    %167 = vector.shape_cast %166 : vector<16xf32> to vector<16x1xf32>
    %cst_75 = arith.constant 3.200000e+01 : f32
    %168 = vector.broadcast %cst_75 : f32 to vector<16x1xf32>
    %169 = arith.divf %167, %168 : vector<16x1xf32>
    %170 = vector.broadcast %169 : vector<16x1xf32> to vector<16x32xf32>
    %171 = arith.subf %165, %170 : vector<16x32xf32>
    %172 = arith.mulf %171, %171 : vector<16x32xf32>
    %cst_76 = arith.constant dense<0.000000e+00> : vector<16xf32>
    %173 = vector.multi_reduction <add>, %172, %cst_76 [1] : vector<16x32xf32> to vector<16xf32>
    %174 = vector.shape_cast %173 : vector<16xf32> to vector<16x1xf32>
    %cst_77 = arith.constant 3.200000e+01 : f32
    %175 = vector.broadcast %cst_77 : f32 to vector<16x1xf32>
    %176 = arith.divf %174, %175 : vector<16x1xf32>
    %177 = vector.broadcast %169 : vector<16x1xf32> to vector<16x32xf32>
    %178 = arith.subf %165, %177 : vector<16x32xf32>
    %cst_78 = arith.constant 9.99999974E-6 : f32
    %179 = vector.broadcast %cst_78 : f32 to vector<16x1xf32>
    %180 = arith.addf %176, %179 : vector<16x1xf32>
    %181 = math.rsqrt %180 : vector<16x1xf32>
    %182 = vector.broadcast %181 : vector<16x1xf32> to vector<16x32xf32>
    %183 = arith.mulf %178, %182 : vector<16x32xf32>
    %184 = vector.extract_strided_slice %11 {offsets = [3, 0], sizes = [1, 32], strides = [1, 1]} : vector<4x32xf32> to vector<1x32xf32>
    %185 = vector.broadcast %184 : vector<1x32xf32> to vector<16x32xf32>
    %186 = arith.mulf %183, %185 : vector<16x32xf32>
    %187 = vector.extract_strided_slice %12 {offsets = [3, 0], sizes = [1, 32], strides = [1, 1]} : vector<4x32xf32> to vector<1x32xf32>
    %188 = vector.broadcast %187 : vector<1x32xf32> to vector<16x32xf32>
    %189 = arith.addf %186, %188 : vector<16x32xf32>
    %cst_79 = arith.constant dense<0.000000e+00> : vector<32xf32>
    %190 = vector.multi_reduction <add>, %189, %cst_79 [0] : vector<16x32xf32> to vector<32xf32>
    %191 = vector.shape_cast %190 : vector<32xf32> to vector<1x32xf32>
    %cst_80 = arith.constant 6.250000e-02 : f32
    %192 = vector.broadcast %cst_80 : f32 to vector<1x32xf32>
    %193 = arith.mulf %191, %192 : vector<1x32xf32>
    %c0_81 = arith.constant 0 : index
    %c96 = arith.constant 96 : index
    %194 = vector.load %arg11[%c0_81, %c96] : memref<1x128xf32, #tpu.memory_space<vmem>>, vector<1x32xf32>
    tpu.vector_store %arg11[%c0_81, %c96], %193 {strides = array<i32>} : memref<1x128xf32, #tpu.memory_space<vmem>>, vector<1x32xf32>,
    return
  }
}

</mosaic_0001>

<llo_original>
// kernel: gcn_forward.1
$region0: #{gcn_forward.1}
  #allocation0 [shape = 'u32[]', space=smem, size = 0x4, offset = 0x4, fixed_abs, tag = 'smem constant byte address 0x4 - core index']
  #allocation1 [shape = 'u32[144,128]{1,0:T(1,128)}', space=vmem, size = 0x12000, scoped, tag = 'internal scratch']
  %s0 = inlined_call_operand.vmem [shape: s32[16,1], index: 0, kind: input, shape index: {}]
  %s1 = inlined_call_operand.vmem [shape: f32[16,16], index: 1, kind: input, shape index: {}]
  %s2 = inlined_call_operand.vmem [shape: f32[384,32], index: 2, kind: input, shape index: {}]
  %s3 = inlined_call_operand.vmem [shape: f32[32,32], index: 3, kind: input, shape index: {}]
  %s4 = inlined_call_operand.vmem [shape: f32[32,32], index: 4, kind: input, shape index: {}]
  %s5 = inlined_call_operand.vmem [shape: f32[3,32,32], index: 5, kind: input, shape index: {}]
  %s6 = inlined_call_operand.vmem [shape: f32[3,32,32], index: 6, kind: input, shape index: {}]
  %s7 = inlined_call_operand.vmem [shape: f32[4,32], index: 7, kind: input, shape index: {}]
  %s8 = inlined_call_operand.vmem [shape: f32[4,32], index: 8, kind: input, shape index: {}]
  %s9 = inlined_call_operand.vmem [shape: f32[4,32], index: 9, kind: input, shape index: {}]
  %s10 = inlined_call_operand.vmem [shape: f32[4,32], index: 10, kind: input, shape index: {}]
  %s11 = inlined_call_operand.hbm [shape: f32[1,128], index: 11, kind: output, shape index: {}]
  %s12 = sld [smem:[#allocation0]]
  $region54: #{gcn_forward.1} parent=0
    _
  %s14 = ssub.s32 1, %s12
  %s15 = scalar_select 0, %s14, %s12
  $region1: #{gcn_forward.1} parent=0
    #allocation2 [shape = 'u8[512]{0}', space=vmem, size = 0x400, scoped, tag = 'output window, operand 0, single buffered']
    #allocation3 [shape = 's32[1]{0}', space=sflag, size = 0x4, scoped, tag = 'scoped memory for gcn_forward.1']
    %16 = vsyncpa [#allocation3], 0
    // Predicated region
    $region2: #{gcn_forward.1} parent=1 // pred_check
      _
    $region3: #{gcn_forward.1} parent=1 // pred_check_branch
      %18 = sbr.rel (0) target = $region5
    $region4: #{gcn_forward.1} parent=1 // pred_region
      _
    $region5: #{gcn_forward.1} parent=1 // pred_fallthru
      _
    // Predicated region
    $region6: #{gcn_forward.1} parent=1 // pred_check
      _
    $region7: #{gcn_forward.1} parent=1 // pred_check_branch
      %20 = sbr.rel (0) target = $region9
    $region8: #{gcn_forward.1} parent=1 // pred_region
      _
    $region9: #{gcn_forward.1} parent=1 // pred_fallthru
      _
    // Predicated region
    $region10: #{gcn_forward.1} parent=1 // pred_check
      _
    $region11: #{gcn_forward.1} parent=1 // pred_check_branch
      %22 = sbr.rel (0) target = $region13
    $region12: #{gcn_forward.1} parent=1 // pred_region
      _
    $region13: #{gcn_forward.1} parent=1 // pred_fallthru
      _
    // Predicated region
    $region14: #{gcn_forward.1} parent=1 // pred_check
      _
    $region15: #{gcn_forward.1} parent=1 // pred_check_branch
      %24 = sbr.rel (0) target = $region17
    $region16: #{gcn_forward.1} parent=1 // pred_region
      _
    $region17: #{gcn_forward.1} parent=1 // pred_fallthru
      _
    // Predicated region
    $region18: #{gcn_forward.1} parent=1 // pred_check
      _
    $region19: #{gcn_forward.1} parent=1 // pred_check_branch
      %26 = sbr.rel (0) target = $region21
    $region20: #{gcn_forward.1} parent=1 // pred_region
      _
    $region21: #{gcn_forward.1} parent=1 // pred_fallthru
      _
    // Predicated region
    $region22: #{gcn_forward.1} parent=1 // pred_check
      _
    $region23: #{gcn_forward.1} parent=1 // pred_check_branch
      %28 = sbr.rel (0) target = $region25
    $region24: #{gcn_forward.1} parent=1 // pred_region
      _
    $region25: #{gcn_forward.1} parent=1 // pred_fallthru
      _
    // Predicated region
    $region26: #{gcn_forward.1} parent=1 // pred_check
      _
    $region27: #{gcn_forward.1} parent=1 // pred_check_branch
      %30 = sbr.rel (0) target = $region29
    $region28: #{gcn_forward.1} parent=1 // pred_region
      _
    $region29: #{gcn_forward.1} parent=1 // pred_fallthru
      _
    // Predicated region
    $region30: #{gcn_forward.1} parent=1 // pred_check
      _
    $region31: #{gcn_forward.1} parent=1 // pred_check_branch
      %32 = sbr.rel (0) target = $region33
    $region32: #{gcn_forward.1} parent=1 // pred_region
      _
    $region33: #{gcn_forward.1} parent=1 // pred_fallthru
      _
    // Predicated region
    $region34: #{gcn_forward.1} parent=1 // pred_check
      _
    $region35: #{gcn_forward.1} parent=1 // pred_check_branch
      %34 = sbr.rel (0) target = $region37
    $region36: #{gcn_forward.1} parent=1 // pred_region
      _
    $region37: #{gcn_forward.1} parent=1 // pred_fallthru
      _
    // Predicated region
    $region38: #{gcn_forward.1} parent=1 // pred_check
      _
    $region39: #{gcn_forward.1} parent=1 // pred_check_branch
      %36 = sbr.rel (0) target = $region41
    $region40: #{gcn_forward.1} parent=1 // pred_region
      _
    $region41: #{gcn_forward.1} parent=1 // pred_fallthru
      _
    // Predicated region
    $region42: #{gcn_forward.1} parent=1 // pred_check
      _
    $region43: #{gcn_forward.1} parent=1 // pred_check_branch
      %38 = sbr.rel (0) target = $region45
    $region44: #{gcn_forward.1} parent=1 // pred_region
      _
    $region45: #{gcn_forward.1} parent=1 // pred_fallthru
      _
    %v39 = vld [vmem:[%s0] sm:$0xff]
    %v40 = vld [vmem:[%s0 + $0x8] sm:$0xff]
    %v41 = vlaneseq
    %v42 = vand.u32 %v41, 127
    %v43 = vadd.s32 %v42, 128
    %v44 = vadd.s32 %v42, 256
    %45 = vset.pattern.permute.xlu0 0
    %46 = vperm.xlu0 %45, %v39
    %v47 = vpop.permute.xlu0 %46
    %48 = vset.pattern.permute.xlu0 0
    %49 = vperm.xlu0 %48, %v40
    %v50 = vpop.permute.xlu0 %49
    %vm51 = vcmp.eq.s32.totalorder %v42, %v47
    %vm52 = vcmp.eq.s32.totalorder %v43, %v47
    %vm53 = vcmp.eq.s32.totalorder %v44, %v47
    %vm54 = vcmp.eq.s32.totalorder %v42, %v50
    %vm55 = vcmp.eq.s32.totalorder %v43, %v50
    %vm56 = vcmp.eq.s32.totalorder %v44, %v50
    %v57 = vsel %vm51, 1, 0
    %v58 = vsel %vm52, 1, 0
    %v59 = vsel %vm53, 1, 0
    %v60 = vsel %vm54, 1, 0
    %v61 = vsel %vm55, 1, 0
    %v62 = vsel %vm56, 1, 0
    %v63 = vcvt.s32.f32 %v57
    %v64 = vcvt.s32.f32 %v58
    %v65 = vcvt.s32.f32 %v59
    %v66 = vcvt.s32.f32 %v60
    %v67 = vcvt.s32.f32 %v61
    %v68 = vcvt.s32.f32 %v62
    %v69 = vld [vmem:[%s2] sm:$0xff]
    %v70 = vld [vmem:[%s2 + $0x8] sm:$0xff]
    %v71 = vld [vmem:[%s2 + $0x10] sm:$0xff]
    %v72 = vld [vmem:[%s2 + $0x18] sm:$0xff]
    %v73 = vld [vmem:[%s2 + $0x20] sm:$0xff]
    %v74 = vld [vmem:[%s2 + $0x28] sm:$0xff]
    %v75 = vld [vmem:[%s2 + $0x30] sm:$0xff]
    %v76 = vld [vmem:[%s2 + $0x38] sm:$0xff]
    %v77 = vld [vmem:[%s2 + $0x40] sm:$0xff]
    %v78 = vld [vmem:[%s2 + $0x48] sm:$0xff]
    %v79 = vld [vmem:[%s2 + $0x50] sm:$0xff]
    %v80 = vld [vmem:[%s2 + $0x58] sm:$0xff]
    %v81 = vld [vmem:[%s2 + $0x60] sm:$0xff]
    %v82 = vld [vmem:[%s2 + $0x68] sm:$0xff]
    %v83 = vld [vmem:[%s2 + $0x70] sm:$0xff]
    %v84 = vld [vmem:[%s2 + $0x78] sm:$0xff]
    %v85 = vld [vmem:[%s2 + $0x80] sm:$0xff]
    %v86 = vld [vmem:[%s2 + $0x88] sm:$0xff]
    %v87 = vld [vmem:[%s2 + $0x90] sm:$0xff]
    %v88 = vld [vmem:[%s2 + $0x98] sm:$0xff]
    %v89 = vld [vmem:[%s2 + $0xa0] sm:$0xff]
    %v90 = vld [vmem:[%s2 + $0xa8] sm:$0xff]
    %v91 = vld [vmem:[%s2 + $0xb0] sm:$0xff]
    %v92 = vld [vmem:[%s2 + $0xb8] sm:$0xff]
    %v93 = vld [vmem:[%s2 + $0xc0] sm:$0xff]
    %v94 = vld [vmem:[%s2 + $0xc8] sm:$0xff]
    %v95 = vld [vmem:[%s2 + $0xd0] sm:$0xff]
    %v96 = vld [vmem:[%s2 + $0xd8] sm:$0xff]
    %v97 = vld [vmem:[%s2 + $0xe0] sm:$0xff]
    %v98 = vld [vmem:[%s2 + $0xe8] sm:$0xff]
    %v99 = vld [vmem:[%s2 + $0xf0] sm:$0xff]
    %v100 = vld [vmem:[%s2 + $0xf8] sm:$0xff]
    %v101 = vld [vmem:[%s2 + $0x100] sm:$0xff]
    %v102 = vld [vmem:[%s2 + $0x108] sm:$0xff]
    %v103 = vld [vmem:[%s2 + $0x110] sm:$0xff]
    %v104 = vld [vmem:[%s2 + $0x118] sm:$0xff]
    %v105 = vld [vmem:[%s2 + $0x120] sm:$0xff]
    %v106 = vld [vmem:[%s2 + $0x128] sm:$0xff]
    %v107 = vld [vmem:[%s2 + $0x130] sm:$0xff]
    %v108 = vld [vmem:[%s2 + $0x138] sm:$0xff]
    %v109 = vld [vmem:[%s2 + $0x140] sm:$0xff]
    %v110 = vld [vmem:[%s2 + $0x148] sm:$0xff]
    %v111 = vld [vmem:[%s2 + $0x150] sm:$0xff]
    %v112 = vld [vmem:[%s2 + $0x158] sm:$0xff]
    %v113 = vld [vmem:[%s2 + $0x160] sm:$0xff]
    %v114 = vld [vmem:[%s2 + $0x168] sm:$0xff]
    %v115 = vld [vmem:[%s2 + $0x170] sm:$0xff]
    %v116 = vld [vmem:[%s2 + $0x178] sm:$0xff]
    %117 = vmatprep.subr.mxu0 0.0
    %118 = vmatpush1.msra.mxu0 %v84
    %119 = vmatprep.subr.mxu0 0.0
    %120 = vmatpush1.msra.mxu0 %v83
    %121 = vmatprep.subr.mxu0 0.0
    %122 = vmatpush1.msra.mxu0 %v82
    %123 = vmatprep.subr.mxu0 0.0
    %124 = vmatpush1.msra.mxu0 %v81
    %125 = vmatprep.subr.mxu0 0.0
    %126 = vmatpush1.msra.mxu0 %v80
    %127 = vmatprep.subr.mxu0 0.0
    %128 = vmatpush1.msra.mxu0 %v79
    %129 = vmatprep.subr.mxu0 0.0
    %130 = vmatpush1.msra.mxu0 %v78
    %131 = vmatprep.subr.mxu0 0.0
    %132 = vmatpush1.msra.mxu0 %v77
    %133 = vmatprep.subr.mxu0 0.0
    %134 = vmatpush1.msra.mxu0 %v76
    %135 = vmatprep.subr.mxu0 0.0
    %136 = vmatpush1.msra.mxu0 %v75
    %137 = vmatprep.subr.mxu0 0.0
    %138 = vmatpush1.msra.mxu0 %v74
    %139 = vmatprep.subr.mxu0 0.0
    %140 = vmatpush1.msra.mxu0 %v73
    %141 = vmatprep.subr.mxu0 0.0
    %142 = vmatpush1.msra.mxu0 %v72
    %143 = vmatprep.subr.mxu0 0.0
    %144 = vmatpush1.msra.mxu0 %v71
    %145 = vmatprep.subr.mxu0 0.0
    %146 = vmatpush1.msra.mxu0 %v70
    %147 = vmatprep.subr.mxu0 0.0
    %148 = vmatpush1.msra.mxu0 %v69
    %149 = vmatprep.subr.mxu0 0.0
    %150 = vmatpush2.msra.mxu0 %v100
    %151 = vmatprep.subr.mxu0 0.0
    %152 = vmatpush2.msra.mxu0 %v99
    %153 = vmatprep.subr.mxu0 0.0
    %154 = vmatpush2.msra.mxu0 %v98
    %155 = vmatprep.subr.mxu0 0.0
    %156 = vmatpush2.msra.mxu0 %v97
    %157 = vmatprep.subr.mxu0 0.0
    %158 = vmatpush2.msra.mxu0 %v96
    %159 = vmatprep.subr.mxu0 0.0
    %160 = vmatpush2.msra.mxu0 %v95
    %161 = vmatprep.subr.mxu0 0.0
    %162 = vmatpush2.msra.mxu0 %v94
    %163 = vmatprep.subr.mxu0 0.0
    %164 = vmatpush2.msra.mxu0 %v93
    %165 = vmatprep.subr.mxu0 0.0
    %166 = vmatpush2.msra.mxu0 %v92
    %167 = vmatprep.subr.mxu0 0.0
    %168 = vmatpush2.msra.mxu0 %v91
    %169 = vmatprep.subr.mxu0 0.0
    %170 = vmatpush2.msra.mxu0 %v90
    %171 = vmatprep.subr.mxu0 0.0
    %172 = vmatpush2.msra.mxu0 %v89
    %173 = vmatprep.subr.mxu0 0.0
    %174 = vmatpush2.msra.mxu0 %v88
    %175 = vmatprep.subr.mxu0 0.0
    %176 = vmatpush2.msra.mxu0 %v87
    %177 = vmatprep.subr.mxu0 0.0
    %178 = vmatpush2.msra.mxu0 %v86
    %179 = vmatprep.subr.mxu0 0.0
    %180 = vmatpush2.msra.mxu0 %v85
    %181 = vmatprep.mubr.f32.mxu0 %v64
    %182 = vmatmul.mubr.f32.gmra.mxu0 %v63
    %v183 = vpop.f32.mrf.mxu0
    %v184 = vadd.f32 0.0, %v183
    %v185 = vpop.f32.mrf.mxu0
    %186 = vmatprep.mubr.f32.mxu0 %v67
    %187 = vmatmul.mubr.f32.gmra.mxu0 %v66
    %v188 = vpop.f32.mrf.mxu0
    %v189 = vadd.f32 0.0, %v188
    %v190 = vpop.f32.mrf.mxu0
    %191 = vdwg.mxu0
    %192 = vmatprep.subr.mxu0 0.0
    %193 = vmatpush1.msra.mxu0 %v116
    %194 = vmatprep.subr.mxu0 0.0
    %195 = vmatpush1.msra.mxu0 %v115
    %196 = vmatprep.subr.mxu0 0.0
    %197 = vmatpush1.msra.mxu0 %v114
    %198 = vmatprep.subr.mxu0 0.0
    %199 = vmatpush1.msra.mxu0 %v113
    %200 = vmatprep.subr.mxu0 0.0
    %201 = vmatpush1.msra.mxu0 %v112
    %202 = vmatprep.subr.mxu0 0.0
    %203 = vmatpush1.msra.mxu0 %v111
    %204 = vmatprep.subr.mxu0 0.0
    %205 = vmatpush1.msra.mxu0 %v110
    %206 = vmatprep.subr.mxu0 0.0
    %207 = vmatpush1.msra.mxu0 %v109
    %208 = vmatprep.subr.mxu0 0.0
    %209 = vmatpush1.msra.mxu0 %v108
    %210 = vmatprep.subr.mxu0 0.0
    %211 = vmatpush1.msra.mxu0 %v107
    %212 = vmatprep.subr.mxu0 0.0
    %213 = vmatpush1.msra.mxu0 %v106
    %214 = vmatprep.subr.mxu0 0.0
    %215 = vmatpush1.msra.mxu0 %v105
    %216 = vmatprep.subr.mxu0 0.0
    %217 = vmatpush1.msra.mxu0 %v104
    %218 = vmatprep.subr.mxu0 0.0
    %219 = vmatpush1.msra.mxu0 %v103
    %220 = vmatprep.subr.mxu0 0.0
    %221 = vmatpush1.msra.mxu0 %v102
    %222 = vmatprep.subr.mxu0 0.0
    %223 = vmatpush1.msra.mxu0 %v101
    %224 = vmatprep.subr.mxu0 0.0
    %225 = vmatpush2.msra.mxu0 0.0
    %226 = vmatprep.subr.mxu0 0.0
    %227 = vmatpush2.msra.mxu0 0.0
    %228 = vmatprep.subr.mxu0 0.0
    %229 = vmatpush2.msra.mxu0 0.0
    %230 = vmatprep.subr.mxu0 0.0
    %231 = vmatpush2.msra.mxu0 0.0
    %232 = vmatprep.subr.mxu0 0.0
    %233 = vmatpush2.msra.mxu0 0.0
    %234 = vmatprep.subr.mxu0 0.0
    %235 = vmatpush2.msra.mxu0 0.0
    %236 = vmatprep.subr.mxu0 0.0
    %237 = vmatpush2.msra.mxu0 0.0
    %238 = vmatprep.subr.mxu0 0.0
    %239 = vmatpush2.msra.mxu0 0.0
    %240 = vmatprep.subr.mxu0 0.0
    %241 = vmatpush2.msra.mxu0 0.0
    %242 = vmatprep.subr.mxu0 0.0
    %243 = vmatpush2.msra.mxu0 0.0
    %244 = vmatprep.subr.mxu0 0.0
    %245 = vmatpush2.msra.mxu0 0.0
    %246 = vmatprep.subr.mxu0 0.0
    %247 = vmatpush2.msra.mxu0 0.0
    %248 = vmatprep.subr.mxu0 0.0
    %249 = vmatpush2.msra.mxu0 0.0
    %250 = vmatprep.subr.mxu0 0.0
    %251 = vmatpush2.msra.mxu0 0.0
    %252 = vmatprep.subr.mxu0 0.0
    %253 = vmatpush2.msra.mxu0 0.0
    %254 = vmatprep.subr.mxu0 0.0
    %255 = vmatpush2.msra.mxu0 0.0
    %256 = vmatprep.mubr.f32.mxu0 0.0
    %257 = vmatmul.mubr.f32.gmra.mxu0 %v65
    %v258 = vpop.f32.mrf.mxu0
    %v259 = vadd.f32 %v184, %v258
    %v260 = vpop.f32.mrf.mxu0
    %261 = vmatprep.mubr.f32.mxu0 0.0
    %262 = vmatmul.mubr.f32.gmra.mxu0 %v68
    %v263 = vpop.f32.mrf.mxu0
    %v264 = vadd.f32 %v189, %v263
    %v265 = vpop.f32.mrf.mxu0
    %266 = vdwg.mxu0
    %v267 = vld [vmem:[%s1] sm:$0xff]
    %v268 = vld [vmem:[%s1 + $0x8] sm:$0xff]
    %v269 = vld [vmem:[%s7] sm:$0xf]
    %v270 = vld [vmem:[%s8] sm:$0xf]
    %v271 = vld [vmem:[%s9] sm:$0xf]
    %v272 = vld [vmem:[%s10] sm:$0xf]
    %vm273 = vcmask 130048
    %v275 = vsel %vm273, %v267, 0
    %v278 = vsel %vm273, %v268, 0
    %280 = vmatprep.subr.mxu0 0.0
    %281 = vmatpush1.msra.mxu0 0.0
    %282 = vmatprep.subr.mxu0 0.0
    %283 = vmatpush1.msra.mxu0 0.0
    %284 = vmatprep.subr.mxu0 0.0
    %285 = vmatpush1.msra.mxu0 0.0
    %286 = vmatprep.subr.mxu0 0.0
    %287 = vmatpush1.msra.mxu0 0.0
    %288 = vmatprep.subr.mxu0 0.0
    %289 = vmatpush1.msra.mxu0 0.0
    %290 = vmatprep.subr.mxu0 0.0
    %291 = vmatpush1.msra.mxu0 0.0
    %292 = vmatprep.subr.mxu0 0.0
    %293 = vmatpush1.msra.mxu0 0.0
    %294 = vmatprep.subr.mxu0 0.0
    %295 = vmatpush1.msra.mxu0 0.0
    %296 = vmatprep.subr.mxu0 0.0
    %297 = vmatpush1.msra.mxu0 0.0
    %298 = vmatprep.subr.mxu0 0.0
    %299 = vmatpush1.msra.mxu0 0.0
    %300 = vmatprep.subr.mxu0 0.0
    %301 = vmatpush1.msra.mxu0 0.0
    %302 = vmatprep.subr.mxu0 0.0
    %303 = vmatpush1.msra.mxu0 0.0
    %304 = vmatprep.subr.mxu0 0.0
    %305 = vmatpush1.msra.mxu0 0.0
    %306 = vmatprep.subr.mxu0 0.0
    %307 = vmatpush1.msra.mxu0 0.0
    %308 = vmatprep.subr.mxu0 0.0
    %309 = vmatpush1.msra.mxu0 %v264
    %310 = vmatprep.subr.mxu0 0.0
    %311 = vmatpush1.msra.mxu0 %v259
    %312 = vmatprep.subr.mxu0 0.0
    %313 = vmatpush2.msra.mxu0 0.0
    %314 = vmatprep.subr.mxu0 0.0
    %315 = vmatpush2.msra.mxu0 0.0
    %316 = vmatprep.subr.mxu0 0.0
    %317 = vmatpush2.msra.mxu0 0.0
    %318 = vmatprep.subr.mxu0 0.0
    %319 = vmatpush2.msra.mxu0 0.0
    %320 = vmatprep.subr.mxu0 0.0
    %321 = vmatpush2.msra.mxu0 0.0
    %322 = vmatprep.subr.mxu0 0.0
    %323 = vmatpush2.msra.mxu0 0.0
    %324 = vmatprep.subr.mxu0 0.0
    %325 = vmatpush2.msra.mxu0 0.0
    %326 = vmatprep.subr.mxu0 0.0
    %327 = vmatpush2.msra.mxu0 0.0
    %328 = vmatprep.subr.mxu0 0.0
    %329 = vmatpush2.msra.mxu0 0.0
    %330 = vmatprep.subr.mxu0 0.0
    %331 = vmatpush2.msra.mxu0 0.0
    %332 = vmatprep.subr.mxu0 0.0
    %333 = vmatpush2.msra.mxu0 0.0
    %334 = vmatprep.subr.mxu0 0.0
    %335 = vmatpush2.msra.mxu0 0.0
    %336 = vmatprep.subr.mxu0 0.0
    %337 = vmatpush2.msra.mxu0 0.0
    %338 = vmatprep.subr.mxu0 0.0
    %339 = vmatpush2.msra.mxu0 0.0
    %340 = vmatprep.subr.mxu0 0.0
    %341 = vmatpush2.msra.mxu0 0.0
    %342 = vmatprep.subr.mxu0 0.0
    %343 = vmatpush2.msra.mxu0 0.0
    %344 = vmatprep.mubr.f32.mxu0 0.0
    %345 = vmatmul.mubr.f32.gmra.mxu0 %v275
    %v346 = vpop.f32.mrf.mxu0
    %v347 = vadd.f32 0.0, %v346
    %v348 = vpop.f32.mrf.mxu0
    %349 = vmatprep.mubr.f32.mxu0 0.0
    %350 = vmatmul.mubr.f32.gmra.mxu0 %v278
    %v351 = vpop.f32.mrf.mxu0
    %v352 = vadd.f32 0.0, %v351
    %v353 = vpop.f32.mrf.mxu0
    %354 = vdwg.mxu0
    %v355 = vld [vmem:[%s3] sm:$0xff]
    %v356 = vld [vmem:[%s3 + $0x8] sm:$0xff]
    %v357 = vld [vmem:[%s3 + $0x10] sm:$0xff]
    %v358 = vld [vmem:[%s3 + $0x18] sm:$0xff]
    %v359 = vld [vmem:[%s4] sm:$0xff]
    %v360 = vld [vmem:[%s4 + $0x8] sm:$0xff]
    %v361 = vld [vmem:[%s4 + $0x10] sm:$0xff]
    %v362 = vld [vmem:[%s4 + $0x18] sm:$0xff]
    %vm363 = vcmask 261120
    %v365 = vsel %vm363, %v347, 0
    %v368 = vsel %vm363, %v352, 0
    %370 = vmatprep.subr.mxu0 0.0
    %371 = vmatpush1.msra.mxu0 0.0
    %372 = vmatprep.subr.mxu0 0.0
    %373 = vmatpush1.msra.mxu0 0.0
    %374 = vmatprep.subr.mxu0 0.0
    %375 = vmatpush1.msra.mxu0 0.0
    %376 = vmatprep.subr.mxu0 0.0
    %377 = vmatpush1.msra.mxu0 0.0
    %378 = vmatprep.subr.mxu0 0.0
    %379 = vmatpush1.msra.mxu0 0.0
    %380 = vmatprep.subr.mxu0 0.0
    %381 = vmatpush1.msra.mxu0 0.0
    %382 = vmatprep.subr.mxu0 0.0
    %383 = vmatpush1.msra.mxu0 0.0
    %384 = vmatprep.subr.mxu0 0.0
    %385 = vmatpush1.msra.mxu0 0.0
    %386 = vmatprep.subr.mxu0 0.0
    %387 = vmatpush1.msra.mxu0 0.0
    %388 = vmatprep.subr.mxu0 0.0
    %389 = vmatpush1.msra.mxu0 0.0
    %390 = vmatprep.subr.mxu0 0.0
    %391 = vmatpush1.msra.mxu0 0.0
    %392 = vmatprep.subr.mxu0 0.0
    %393 = vmatpush1.msra.mxu0 0.0
    %394 = vmatprep.subr.mxu0 0.0
    %395 = vmatpush1.msra.mxu0 %v362
    %396 = vmatprep.subr.mxu0 0.0
    %397 = vmatpush1.msra.mxu0 %v361
    %398 = vmatprep.subr.mxu0 0.0
    %399 = vmatpush1.msra.mxu0 %v360
    %400 = vmatprep.subr.mxu0 0.0
    %401 = vmatpush1.msra.mxu0 %v359
    %402 = vmatprep.subr.mxu0 0.0
    %403 = vmatpush2.msra.mxu0 0.0
    %404 = vmatprep.subr.mxu0 0.0
    %405 = vmatpush2.msra.mxu0 0.0
    %406 = vmatprep.subr.mxu0 0.0
    %407 = vmatpush2.msra.mxu0 0.0
    %408 = vmatprep.subr.mxu0 0.0
    %409 = vmatpush2.msra.mxu0 0.0
    %410 = vmatprep.subr.mxu0 0.0
    %411 = vmatpush2.msra.mxu0 0.0
    %412 = vmatprep.subr.mxu0 0.0
    %413 = vmatpush2.msra.mxu0 0.0
    %414 = vmatprep.subr.mxu0 0.0
    %415 = vmatpush2.msra.mxu0 0.0
    %416 = vmatprep.subr.mxu0 0.0
    %417 = vmatpush2.msra.mxu0 0.0
    %418 = vmatprep.subr.mxu0 0.0
    %419 = vmatpush2.msra.mxu0 0.0
    %420 = vmatprep.subr.mxu0 0.0
    %421 = vmatpush2.msra.mxu0 0.0
    %422 = vmatprep.subr.mxu0 0.0
    %423 = vmatpush2.msra.mxu0 0.0
    %424 = vmatprep.subr.mxu0 0.0
    %425 = vmatpush2.msra.mxu0 0.0
    %426 = vmatprep.subr.mxu0 0.0
    %427 = vmatpush2.msra.mxu0 0.0
    %428 = vmatprep.subr.mxu0 0.0
    %429 = vmatpush2.msra.mxu0 0.0
    %430 = vmatprep.subr.mxu0 0.0
    %431 = vmatpush2.msra.mxu0 0.0
    %432 = vmatprep.subr.mxu0 0.0
    %433 = vmatpush2.msra.mxu0 0.0
    %434 = vmatprep.mubr.f32.mxu0 0.0
    %435 = vmatmul.mubr.f32.gmra.mxu0 %v365
    %v436 = vpop.f32.mrf.mxu0
    %v437 = vadd.f32 0.0, %v436
    %v438 = vpop.f32.mrf.mxu0
    %439 = vmatprep.mubr.f32.mxu0 0.0
    %440 = vmatmul.mubr.f32.gmra.mxu0 %v368
    %v441 = vpop.f32.mrf.mxu0
    %v442 = vadd.f32 0.0, %v441
    %v443 = vpop.f32.mrf.mxu0
    %444 = vdwg.mxu0
    %v446 = vsel %vm363, %v259, 0
    %v449 = vsel %vm363, %v264, 0
    %451 = vmatprep.subr.mxu0 0.0
    %452 = vmatpush1.msra.mxu0 0.0
    %453 = vmatprep.subr.mxu0 0.0
    %454 = vmatpush1.msra.mxu0 0.0
    %455 = vmatprep.subr.mxu0 0.0
    %456 = vmatpush1.msra.mxu0 0.0
    %457 = vmatprep.subr.mxu0 0.0
    %458 = vmatpush1.msra.mxu0 0.0
    %459 = vmatprep.subr.mxu0 0.0
    %460 = vmatpush1.msra.mxu0 0.0
    %461 = vmatprep.subr.mxu0 0.0
    %462 = vmatpush1.msra.mxu0 0.0
    %463 = vmatprep.subr.mxu0 0.0
    %464 = vmatpush1.msra.mxu0 0.0
    %465 = vmatprep.subr.mxu0 0.0
    %466 = vmatpush1.msra.mxu0 0.0
    %467 = vmatprep.subr.mxu0 0.0
    %468 = vmatpush1.msra.mxu0 0.0
    %469 = vmatprep.subr.mxu0 0.0
    %470 = vmatpush1.msra.mxu0 0.0
    %471 = vmatprep.subr.mxu0 0.0
    %472 = vmatpush1.msra.mxu0 0.0
    %473 = vmatprep.subr.mxu0 0.0
    %474 = vmatpush1.msra.mxu0 0.0
    %475 = vmatprep.subr.mxu0 0.0
    %476 = vmatpush1.msra.mxu0 %v358
    %477 = vmatprep.subr.mxu0 0.0
    %478 = vmatpush1.msra.mxu0 %v357
    %479 = vmatprep.subr.mxu0 0.0
    %480 = vmatpush1.msra.mxu0 %v356
    %481 = vmatprep.subr.mxu0 0.0
    %482 = vmatpush1.msra.mxu0 %v355
    %483 = vmatprep.subr.mxu0 0.0
    %484 = vmatpush2.msra.mxu0 0.0
    %485 = vmatprep.subr.mxu0 0.0
    %486 = vmatpush2.msra.mxu0 0.0
    %487 = vmatprep.subr.mxu0 0.0
    %488 = vmatpush2.msra.mxu0 0.0
    %489 = vmatprep.subr.mxu0 0.0
    %490 = vmatpush2.msra.mxu0 0.0
    %491 = vmatprep.subr.mxu0 0.0
    %492 = vmatpush2.msra.mxu0 0.0
    %493 = vmatprep.subr.mxu0 0.0
    %494 = vmatpush2.msra.mxu0 0.0
    %495 = vmatprep.subr.mxu0 0.0
    %496 = vmatpush2.msra.mxu0 0.0
    %497 = vmatprep.subr.mxu0 0.0
    %498 = vmatpush2.msra.mxu0 0.0
    %499 = vmatprep.subr.mxu0 0.0
    %500 = vmatpush2.msra.mxu0 0.0
    %501 = vmatprep.subr.mxu0 0.0
    %502 = vmatpush2.msra.mxu0 0.0
    %503 = vmatprep.subr.mxu0 0.0
    %504 = vmatpush2.msra.mxu0 0.0
    %505 = vmatprep.subr.mxu0 0.0
    %506 = vmatpush2.msra.mxu0 0.0
    %507 = vmatprep.subr.mxu0 0.0
    %508 = vmatpush2.msra.mxu0 0.0
    %509 = vmatprep.subr.mxu0 0.0
    %510 = vmatpush2.msra.mxu0 0.0
    %511 = vmatprep.subr.mxu0 0.0
    %512 = vmatpush2.msra.mxu0 0.0
    %513 = vmatprep.subr.mxu0 0.0
    %514 = vmatpush2.msra.mxu0 0.0
    %515 = vmatprep.mubr.f32.mxu0 0.0
    %516 = vmatmul.mubr.f32.gmra.mxu0 %v446
    %v517 = vpop.f32.mrf.mxu0
    %v518 = vadd.f32 %v437, %v517
    %v519 = vpop.f32.mrf.mxu0
    %520 = vmatprep.mubr.f32.mxu0 0.0
    %521 = vmatmul.mubr.f32.gmra.mxu0 %v449
    %v522 = vpop.f32.mrf.mxu0
    %v523 = vadd.f32 %v442, %v522
    %v524 = vpop.f32.mrf.mxu0
    %525 = vdwg.mxu0
    %v526 = vlaneseq
    %v527 = vshrl.u32 %v526, 7
    %v528 = vsub.s32 0, %v527
    %v529 = vrot.slane %v269, %v528
    %v530 = vadd.f32 %v518, %v529
    %v531 = vadd.f32 %v523, %v529
    %vm532 = vcmp.ge.f32.partialorder %v530, 0.0
    %vm533 = vcmp.ge.f32.partialorder %v531, 0.0
    %v534 = vlaneseq
    %v535 = vshrl.u32 %v534, 7
    %v536 = vsub.s32 0, %v535
    %v537 = vrot.slane %v270, %v536
    %v538 = vmul.f32 %v537, %v530
    %v539 = vmul.f32 %v537, %v531
    %v540 = vsel %vm532, %v530, %v538
    %v541 = vsel %vm533, %v531, %v539
    %v542 = vsel %vm363, %v540, 0.0
    %543 = vadd.xlane.f32.xlu0 %v542
    %v544 = vpop.xlane.xlu0 %543
    %v545 = vsel %vm363, %v541, 0.0
    %546 = vadd.xlane.f32.xlu0 %v545
    %v547 = vpop.xlane.xlu0 %546
    %v548 = vrcp.pop 32.0
    %v549 = vmul.f32 %v544, %v548
    %v550 = vmul.f32 %v547, %v548
    %v551 = vsub.f32 %v540, %v549
    %v552 = vsub.f32 %v541, %v550
    %v553 = vmul.f32 %v551, %v551
    %v554 = vmul.f32 %v552, %v552
    %v555 = vsel %vm363, %v553, 0.0
    %556 = vadd.xlane.f32.xlu0 %v555
    %v557 = vpop.xlane.xlu0 %556
    %v558 = vsel %vm363, %v554, 0.0
    %559 = vadd.xlane.f32.xlu0 %v558
    %v560 = vpop.xlane.xlu0 %559
    %v561 = vmul.f32 %v557, %v548
    %v562 = vmul.f32 %v560, %v548
    %v563 = vadd.f32 %v561, 1e-05
    %v564 = vadd.f32 %v562, 1e-05
    %v565 = vrsqrt.pop %v563
    %v566 = vrsqrt.pop %v564
    %v567 = vmul.f32 %v551, %v565
    %v568 = vmul.f32 %v552, %v566
    %v569 = vlaneseq
    %v570 = vshrl.u32 %v569, 7
    %v571 = vsub.s32 0, %v570
    %v572 = vrot.slane %v271, %v571
    %v573 = vmul.f32 %v567, %v572
    %v574 = vmul.f32 %v568, %v572
    %v575 = vlaneseq
    %v576 = vshrl.u32 %v575, 7
    %v577 = vsub.s32 0, %v576
    %v578 = vrot.slane %v272, %v577
    %v579 = vadd.f32 %v573, %v578
    %v580 = vadd.f32 %v574, %v578
    %v581 = vsel %vm363, %v579, 0.0
    %v582 = vsel %vm363, %v580, 0.0
    %v583 = vadd.f32 %v581, %v582
    %v584 = vrot.slane %v583, 4
    %v585 = vadd.f32 %v583, %v584
    %v586 = vrot.slane %v585, 2
    %v587 = vadd.f32 %v585, %v586
    %v588 = vrot.slane %v587, 1
    %v589 = vadd.f32 %v587, %v588
    %v590 = vmul.f32 %v589, 0.0625
    %vm591 = vcmask 253952
    %592 = vst.msk [vmem:[#allocation2] sm:$0x1] %vm591, %v590
    %593 = vmatprep.subr.mxu0 0.0
    %594 = vmatpush1.msra.mxu0 0.0
    %595 = vmatprep.subr.mxu0 0.0
    %596 = vmatpush1.msra.mxu0 0.0
    %597 = vmatprep.subr.mxu0 0.0
    %598 = vmatpush1.msra.mxu0 0.0
    %599 = vmatprep.subr.mxu0 0.0
    %600 = vmatpush1.msra.mxu0 0.0
    %601 = vmatprep.subr.mxu0 0.0
    %602 = vmatpush1.msra.mxu0 0.0
    %603 = vmatprep.subr.mxu0 0.0
    %604 = vmatpush1.msra.mxu0 0.0
    %605 = vmatprep.subr.mxu0 0.0
    %606 = vmatpush1.msra.mxu0 0.0
    %607 = vmatprep.subr.mxu0 0.0
    %608 = vmatpush1.msra.mxu0 0.0
    %609 = vmatprep.subr.mxu0 0.0
    %610 = vmatpush1.msra.mxu0 0.0
    %611 = vmatprep.subr.mxu0 0.0
    %612 = vmatpush1.msra.mxu0 0.0
    %613 = vmatprep.subr.mxu0 0.0
    %614 = vmatpush1.msra.mxu0 0.0
    %615 = vmatprep.subr.mxu0 0.0
    %616 = vmatpush1.msra.mxu0 0.0
    %617 = vmatprep.subr.mxu0 0.0
    %618 = vmatpush1.msra.mxu0 0.0
    %619 = vmatprep.subr.mxu0 0.0
    %620 = vmatpush1.msra.mxu0 0.0
    %621 = vmatprep.subr.mxu0 0.0
    %622 = vmatpush1.msra.mxu0 %v580
    %623 = vmatprep.subr.mxu0 0.0
    %624 = vmatpush1.msra.mxu0 %v579
    %625 = vmatprep.subr.mxu0 0.0
    %626 = vmatpush2.msra.mxu0 0.0
    %627 = vmatprep.subr.mxu0 0.0
    %628 = vmatpush2.msra.mxu0 0.0
    %629 = vmatprep.subr.mxu0 0.0
    %630 = vmatpush2.msra.mxu0 0.0
    %631 = vmatprep.subr.mxu0 0.0
    %632 = vmatpush2.msra.mxu0 0.0
    %633 = vmatprep.subr.mxu0 0.0
    %634 = vmatpush2.msra.mxu0 0.0
    %635 = vmatprep.subr.mxu0 0.0
    %636 = vmatpush2.msra.mxu0 0.0
    %637 = vmatprep.subr.mxu0 0.0
    %638 = vmatpush2.msra.mxu0 0.0
    %639 = vmatprep.subr.mxu0 0.0
    %640 = vmatpush2.msra.mxu0 0.0
    %641 = vmatprep.subr.mxu0 0.0
    %642 = vmatpush2.msra.mxu0 0.0
    %643 = vmatprep.subr.mxu0 0.0
    %644 = vmatpush2.msra.mxu0 0.0
    %645 = vmatprep.subr.mxu0 0.0
    %646 = vmatpush2.msra.mxu0 0.0
    %647 = vmatprep.subr.mxu0 0.0
    %648 = vmatpush2.msra.mxu0 0.0
    %649 = vmatprep.subr.mxu0 0.0
    %650 = vmatpush2.msra.mxu0 0.0
    %651 = vmatprep.subr.mxu0 0.0
    %652 = vmatpush2.msra.mxu0 0.0
    %653 = vmatprep.subr.mxu0 0.0
    %654 = vmatpush2.msra.mxu0 0.0
    %655 = vmatprep.subr.mxu0 0.0
    %656 = vmatpush2.msra.mxu0 0.0
    %657 = vmatprep.mubr.f32.mxu0 0.0
    %658 = vmatmul.mubr.f32.gmra.mxu0 %v275
    %v659 = vpop.f32.mrf.mxu0
    %v660 = vadd.f32 0.0, %v659
    %v661 = vpop.f32.mrf.mxu0
    %662 = vmatprep.mubr.f32.mxu0 0.0
    %663 = vmatmul.mubr.f32.gmra.mxu0 %v278
    %v664 = vpop.f32.mrf.mxu0
    %v665 = vadd.f32 0.0, %v664
    %v666 = vpop.f32.mrf.mxu0
    %667 = vdwg.mxu0
    %v668 = vld [vmem:[%s5] sm:$0xff]
    %v669 = vld [vmem:[%s5 + $0x8] sm:$0xff]
    %v670 = vld [vmem:[%s5 + $0x10] sm:$0xff]
    %v671 = vld [vmem:[%s5 + $0x18] sm:$0xff]
    %v672 = vld [vmem:[%s6] sm:$0xff]
    %v673 = vld [vmem:[%s6 + $0x8] sm:$0xff]
    %v674 = vld [vmem:[%s6 + $0x10] sm:$0xff]
    %v675 = vld [vmem:[%s6 + $0x18] sm:$0xff]
    %v677 = vsel %vm363, %v660, 0
    %v680 = vsel %vm363, %v665, 0
    %682 = vmatprep.subr.mxu0 0.0
    %683 = vmatpush1.msra.mxu0 0.0
    %684 = vmatprep.subr.mxu0 0.0
    %685 = vmatpush1.msra.mxu0 0.0
    %686 = vmatprep.subr.mxu0 0.0
    %687 = vmatpush1.msra.mxu0 0.0
    %688 = vmatprep.subr.mxu0 0.0
    %689 = vmatpush1.msra.mxu0 0.0
    %690 = vmatprep.subr.mxu0 0.0
    %691 = vmatpush1.msra.mxu0 0.0
    %692 = vmatprep.subr.mxu0 0.0
    %693 = vmatpush1.msra.mxu0 0.0
    %694 = vmatprep.subr.mxu0 0.0
    %695 = vmatpush1.msra.mxu0 0.0
    %696 = vmatprep.subr.mxu0 0.0
    %697 = vmatpush1.msra.mxu0 0.0
    %698 = vmatprep.subr.mxu0 0.0
    %699 = vmatpush1.msra.mxu0 0.0
    %700 = vmatprep.subr.mxu0 0.0
    %701 = vmatpush1.msra.mxu0 0.0
    %702 = vmatprep.subr.mxu0 0.0
    %703 = vmatpush1.msra.mxu0 0.0
    %704 = vmatprep.subr.mxu0 0.0
    %705 = vmatpush1.msra.mxu0 0.0
    %706 = vmatprep.subr.mxu0 0.0
    %707 = vmatpush1.msra.mxu0 %v675
    %708 = vmatprep.subr.mxu0 0.0
    %709 = vmatpush1.msra.mxu0 %v674
    %710 = vmatprep.subr.mxu0 0.0
    %711 = vmatpush1.msra.mxu0 %v673
    %712 = vmatprep.subr.mxu0 0.0
    %713 = vmatpush1.msra.mxu0 %v672
    %714 = vmatprep.subr.mxu0 0.0
    %715 = vmatpush2.msra.mxu0 0.0
    %716 = vmatprep.subr.mxu0 0.0
    %717 = vmatpush2.msra.mxu0 0.0
    %718 = vmatprep.subr.mxu0 0.0
    %719 = vmatpush2.msra.mxu0 0.0
    %720 = vmatprep.subr.mxu0 0.0
    %721 = vmatpush2.msra.mxu0 0.0
    %722 = vmatprep.subr.mxu0 0.0
    %723 = vmatpush2.msra.mxu0 0.0
    %724 = vmatprep.subr.mxu0 0.0
    %725 = vmatpush2.msra.mxu0 0.0
    %726 = vmatprep.subr.mxu0 0.0
    %727 = vmatpush2.msra.mxu0 0.0
    %728 = vmatprep.subr.mxu0 0.0
    %729 = vmatpush2.msra.mxu0 0.0
    %730 = vmatprep.subr.mxu0 0.0
    %731 = vmatpush2.msra.mxu0 0.0
    %732 = vmatprep.subr.mxu0 0.0
    %733 = vmatpush2.msra.mxu0 0.0
    %734 = vmatprep.subr.mxu0 0.0
    %735 = vmatpush2.msra.mxu0 0.0
    %736 = vmatprep.subr.mxu0 0.0
    %737 = vmatpush2.msra.mxu0 0.0
    %738 = vmatprep.subr.mxu0 0.0
    %739 = vmatpush2.msra.mxu0 0.0
    %740 = vmatprep.subr.mxu0 0.0
    %741 = vmatpush2.msra.mxu0 0.0
    %742 = vmatprep.subr.mxu0 0.0
    %743 = vmatpush2.msra.mxu0 0.0
    %744 = vmatprep.subr.mxu0 0.0
    %745 = vmatpush2.msra.mxu0 0.0
    %746 = vmatprep.mubr.f32.mxu0 0.0
    %747 = vmatmul.mubr.f32.gmra.mxu0 %v677
    %v748 = vpop.f32.mrf.mxu0
    %v749 = vadd.f32 0.0, %v748
    %v750 = vpop.f32.mrf.mxu0
    %751 = vmatprep.mubr.f32.mxu0 0.0
    %752 = vmatmul.mubr.f32.gmra.mxu0 %v680
    %v753 = vpop.f32.mrf.mxu0
    %v754 = vadd.f32 0.0, %v753
    %v755 = vpop.f32.mrf.mxu0
    %756 = vdwg.mxu0
    %v758 = vsel %vm363, %v579, 0
    %v761 = vsel %vm363, %v580, 0
    %763 = vmatprep.subr.mxu0 0.0
    %764 = vmatpush1.msra.mxu0 0.0
    %765 = vmatprep.subr.mxu0 0.0
    %766 = vmatpush1.msra.mxu0 0.0
    %767 = vmatprep.subr.mxu0 0.0
    %768 = vmatpush1.msra.mxu0 0.0
    %769 = vmatprep.subr.mxu0 0.0
    %770 = vmatpush1.msra.mxu0 0.0
    %771 = vmatprep.subr.mxu0 0.0
    %772 = vmatpush1.msra.mxu0 0.0
    %773 = vmatprep.subr.mxu0 0.0
    %774 = vmatpush1.msra.mxu0 0.0
    %775 = vmatprep.subr.mxu0 0.0
    %776 = vmatpush1.msra.mxu0 0.0
    %777 = vmatprep.subr.mxu0 0.0
    %778 = vmatpush1.msra.mxu0 0.0
    %779 = vmatprep.subr.mxu0 0.0
    %780 = vmatpush1.msra.mxu0 0.0
    %781 = vmatprep.subr.mxu0 0.0
    %782 = vmatpush1.msra.mxu0 0.0
    %783 = vmatprep.subr.mxu0 0.0
    %784 = vmatpush1.msra.mxu0 0.0
    %785 = vmatprep.subr.mxu0 0.0
    %786 = vmatpush1.msra.mxu0 0.0
    %787 = vmatprep.subr.mxu0 0.0
    %788 = vmatpush1.msra.mxu0 %v671
    %789 = vmatprep.subr.mxu0 0.0
    %790 = vmatpush1.msra.mxu0 %v670
    %791 = vmatprep.subr.mxu0 0.0
    %792 = vmatpush1.msra.mxu0 %v669
    %793 = vmatprep.subr.mxu0 0.0
    %794 = vmatpush1.msra.mxu0 %v668
    %795 = vmatprep.subr.mxu0 0.0
    %796 = vmatpush2.msra.mxu0 0.0
    %797 = vmatprep.subr.mxu0 0.0
    %798 = vmatpush2.msra.mxu0 0.0
    %799 = vmatprep.subr.mxu0 0.0
    %800 = vmatpush2.msra.mxu0 0.0
    %801 = vmatprep.subr.mxu0 0.0
    %802 = vmatpush2.msra.mxu0 0.0
    %803 = vmatprep.subr.mxu0 0.0
    %804 = vmatpush2.msra.mxu0 0.0
    %805 = vmatprep.subr.mxu0 0.0
    %806 = vmatpush2.msra.mxu0 0.0
    %807 = vmatprep.subr.mxu0 0.0
    %808 = vmatpush2.msra.mxu0 0.0
    %809 = vmatprep.subr.mxu0 0.0
    %810 = vmatpush2.msra.mxu0 0.0
    %811 = vmatprep.subr.mxu0 0.0
    %812 = vmatpush2.msra.mxu0 0.0
    %813 = vmatprep.subr.mxu0 0.0
    %814 = vmatpush2.msra.mxu0 0.0
    %815 = vmatprep.subr.mxu0 0.0
    %816 = vmatpush2.msra.mxu0 0.0
    %817 = vmatprep.subr.mxu0 0.0
    %818 = vmatpush2.msra.mxu0 0.0
    %819 = vmatprep.subr.mxu0 0.0
    %820 = vmatpush2.msra.mxu0 0.0
    %821 = vmatprep.subr.mxu0 0.0
    %822 = vmatpush2.msra.mxu0 0.0
    %823 = vmatprep.subr.mxu0 0.0
    %824 = vmatpush2.msra.mxu0 0.0
    %825 = vmatprep.subr.mxu0 0.0
    %826 = vmatpush2.msra.mxu0 0.0
    %827 = vmatprep.mubr.f32.mxu0 0.0
    %828 = vmatmul.mubr.f32.gmra.mxu0 %v758
    %v829 = vpop.f32.mrf.mxu0
    %v830 = vadd.f32 %v749, %v829
    %v831 = vpop.f32.mrf.mxu0
    %832 = vmatprep.mubr.f32.mxu0 0.0
    %833 = vmatmul.mubr.f32.gmra.mxu0 %v761
    %v834 = vpop.f32.mrf.mxu0
    %v835 = vadd.f32 %v754, %v834
    %v836 = vpop.f32.mrf.mxu0
    %837 = vdwg.mxu0
    %v838 = vlaneseq
    %v839 = vshrl.u32 %v838, 7
    %v840 = vsub.s32 1, %v839
    %v841 = vrot.slane %v269, %v840
    %v842 = vadd.f32 %v830, %v841
    %v843 = vadd.f32 %v835, %v841
    %vm844 = vcmp.ge.f32.partialorder %v842, 0.0
    %vm845 = vcmp.ge.f32.partialorder %v843, 0.0
    %v846 = vlaneseq
    %v847 = vshrl.u32 %v846, 7
    %v848 = vsub.s32 1, %v847
    %v849 = vrot.slane %v270, %v848
    %v850 = vmul.f32 %v849, %v842
    %v851 = vmul.f32 %v849, %v843
    %v852 = vsel %vm844, %v842, %v850
    %v853 = vsel %vm845, %v843, %v851
    %v854 = vsel %vm363, %v852, 0.0
    %855 = vadd.xlane.f32.xlu0 %v854
    %v856 = vpop.xlane.xlu0 %855
    %v857 = vsel %vm363, %v853, 0.0
    %858 = vadd.xlane.f32.xlu0 %v857
    %v859 = vpop.xlane.xlu0 %858
    %v860 = vmul.f32 %v856, %v548
    %v861 = vmul.f32 %v859, %v548
    %v862 = vsub.f32 %v852, %v860
    %v863 = vsub.f32 %v853, %v861
    %v864 = vmul.f32 %v862, %v862
    %v865 = vmul.f32 %v863, %v863
    %v866 = vsel %vm363, %v864, 0.0
    %867 = vadd.xlane.f32.xlu0 %v866
    %v868 = vpop.xlane.xlu0 %867
    %v869 = vsel %vm363, %v865, 0.0
    %870 = vadd.xlane.f32.xlu0 %v869
    %v871 = vpop.xlane.xlu0 %870
    %v872 = vmul.f32 %v868, %v548
    %v873 = vmul.f32 %v871, %v548
    %v874 = vadd.f32 %v872, 1e-05
    %v875 = vadd.f32 %v873, 1e-05
    %v876 = vrsqrt.pop %v874
    %v877 = vrsqrt.pop %v875
    %v878 = vmul.f32 %v862, %v876
    %v879 = vmul.f32 %v863, %v877
    %v880 = vlaneseq
    %v881 = vshrl.u32 %v880, 7
    %v882 = vsub.s32 1, %v881
    %v883 = vrot.slane %v271, %v882
    %v884 = vmul.f32 %v878, %v883
    %v885 = vmul.f32 %v879, %v883
    %v886 = vlaneseq
    %v887 = vshrl.u32 %v886, 7
    %v888 = vsub.s32 1, %v887
    %v889 = vrot.slane %v272, %v888
    %v890 = vadd.f32 %v884, %v889
    %v891 = vadd.f32 %v885, %v889
    %v892 = vsel %vm363, %v890, 0.0
    %v893 = vsel %vm363, %v891, 0.0
    %v894 = vadd.f32 %v892, %v893
    %v895 = vrot.slane %v894, 4
    %v896 = vadd.f32 %v894, %v895
    %v897 = vrot.slane %v896, 2
    %v898 = vadd.f32 %v896, %v897
    %v899 = vrot.slane %v898, 1
    %v900 = vadd.f32 %v898, %v899
    %v901 = vmul.f32 %v900, 0.0625
    %903 = vrot.lane.b32.xlu0 %v901, 32
    %v904 = vpop.permute.xlu0 %903
    %vm906 = vcmask 516352
    %907 = vst.msk [vmem:[#allocation2] sm:$0x1] %vm906, %v904
    %908 = vmatprep.subr.mxu0 0.0
    %909 = vmatpush1.msra.mxu0 0.0
    %910 = vmatprep.subr.mxu0 0.0
    %911 = vmatpush1.msra.mxu0 0.0
    %912 = vmatprep.subr.mxu0 0.0
    %913 = vmatpush1.msra.mxu0 0.0
    %914 = vmatprep.subr.mxu0 0.0
    %915 = vmatpush1.msra.mxu0 0.0
    %916 = vmatprep.subr.mxu0 0.0
    %917 = vmatpush1.msra.mxu0 0.0
    %918 = vmatprep.subr.mxu0 0.0
    %919 = vmatpush1.msra.mxu0 0.0
    %920 = vmatprep.subr.mxu0 0.0
    %921 = vmatpush1.msra.mxu0 0.0
    %922 = vmatprep.subr.mxu0 0.0
    %923 = vmatpush1.msra.mxu0 0.0
    %924 = vmatprep.subr.mxu0 0.0
    %925 = vmatpush1.msra.mxu0 0.0
    %926 = vmatprep.subr.mxu0 0.0
    %927 = vmatpush1.msra.mxu0 0.0
    %928 = vmatprep.subr.mxu0 0.0
    %929 = vmatpush1.msra.mxu0 0.0
    %930 = vmatprep.subr.mxu0 0.0
    %931 = vmatpush1.msra.mxu0 0.0
    %932 = vmatprep.subr.mxu0 0.0
    %933 = vmatpush1.msra.mxu0 0.0
    %934 = vmatprep.subr.mxu0 0.0
    %935 = vmatpush1.msra.mxu0 0.0
    %936 = vmatprep.subr.mxu0 0.0
    %937 = vmatpush1.msra.mxu0 %v891
    %938 = vmatprep.subr.mxu0 0.0
    %939 = vmatpush1.msra.mxu0 %v890
    %940 = vmatprep.subr.mxu0 0.0
    %941 = vmatpush2.msra.mxu0 0.0
    %942 = vmatprep.subr.mxu0 0.0
    %943 = vmatpush2.msra.mxu0 0.0
    %944 = vmatprep.subr.mxu0 0.0
    %945 = vmatpush2.msra.mxu0 0.0
    %946 = vmatprep.subr.mxu0 0.0
    %947 = vmatpush2.msra.mxu0 0.0
    %948 = vmatprep.subr.mxu0 0.0
    %949 = vmatpush2.msra.mxu0 0.0
    %950 = vmatprep.subr.mxu0 0.0
    %951 = vmatpush2.msra.mxu0 0.0
    %952 = vmatprep.subr.mxu0 0.0
    %953 = vmatpush2.msra.mxu0 0.0
    %954 = vmatprep.subr.mxu0 0.0
    %955 = vmatpush2.msra.mxu0 0.0
    %956 = vmatprep.subr.mxu0 0.0
    %957 = vmatpush2.msra.mxu0 0.0
    %958 = vmatprep.subr.mxu0 0.0
    %959 = vmatpush2.msra.mxu0 0.0
    %960 = vmatprep.subr.mxu0 0.0
    %961 = vmatpush2.msra.mxu0 0.0
    %962 = vmatprep.subr.mxu0 0.0
    %963 = vmatpush2.msra.mxu0 0.0
    %964 = vmatprep.subr.mxu0 0.0
    %965 = vmatpush2.msra.mxu0 0.0
    %966 = vmatprep.subr.mxu0 0.0
    %967 = vmatpush2.msra.mxu0 0.0
    %968 = vmatprep.subr.mxu0 0.0
    %969 = vmatpush2.msra.mxu0 0.0
    %970 = vmatprep.subr.mxu0 0.0
    %971 = vmatpush2.msra.mxu0 0.0
    %972 = vmatprep.mubr.f32.mxu0 0.0
    %973 = vmatmul.mubr.f32.gmra.mxu0 %v275
    %v974 = vpop.f32.mrf.mxu0
    %v975 = vadd.f32 0.0, %v974
    %v976 = vpop.f32.mrf.mxu0
    %977 = vmatprep.mubr.f32.mxu0 0.0
    %978 = vmatmul.mubr.f32.gmra.mxu0 %v278
    %v979 = vpop.f32.mrf.mxu0
    %v980 = vadd.f32 0.0, %v979
    %v981 = vpop.f32.mrf.mxu0
    %982 = vdwg.mxu0
    %s983 = scalar_lea.vmem %s5, 32
    %v984 = vld [vmem:[%s983] sm:$0xff]
    %v985 = vld [vmem:[%s983 + $0x8] sm:$0xff]
    %v986 = vld [vmem:[%s983 + $0x10] sm:$0xff]
    %v987 = vld [vmem:[%s983 + $0x18] sm:$0xff]
    %s988 = scalar_lea.vmem %s6, 32
    %v989 = vld [vmem:[%s988] sm:$0xff]
    %v990 = vld [vmem:[%s988 + $0x8] sm:$0xff]
    %v991 = vld [vmem:[%s988 + $0x10] sm:$0xff]
    %v992 = vld [vmem:[%s988 + $0x18] sm:$0xff]
    %v994 = vsel %vm363, %v975, 0
    %v997 = vsel %vm363, %v980, 0
    %999 = vmatprep.subr.mxu0 0.0
    %1000 = vmatpush1.msra.mxu0 0.0
    %1001 = vmatprep.subr.mxu0 0.0
    %1002 = vmatpush1.msra.mxu0 0.0
    %1003 = vmatprep.subr.mxu0 0.0
    %1004 = vmatpush1.msra.mxu0 0.0
    %1005 = vmatprep.subr.mxu0 0.0
    %1006 = vmatpush1.msra.mxu0 0.0
    %1007 = vmatprep.subr.mxu0 0.0
    %1008 = vmatpush1.msra.mxu0 0.0
    %1009 = vmatprep.subr.mxu0 0.0
    %1010 = vmatpush1.msra.mxu0 0.0
    %1011 = vmatprep.subr.mxu0 0.0
    %1012 = vmatpush1.msra.mxu0 0.0
    %1013 = vmatprep.subr.mxu0 0.0
    %1014 = vmatpush1.msra.mxu0 0.0
    %1015 = vmatprep.subr.mxu0 0.0
    %1016 = vmatpush1.msra.mxu0 0.0
    %1017 = vmatprep.subr.mxu0 0.0
    %1018 = vmatpush1.msra.mxu0 0.0
    %1019 = vmatprep.subr.mxu0 0.0
    %1020 = vmatpush1.msra.mxu0 0.0
    %1021 = vmatprep.subr.mxu0 0.0
    %1022 = vmatpush1.msra.mxu0 0.0
    %1023 = vmatprep.subr.mxu0 0.0
    %1024 = vmatpush1.msra.mxu0 %v992
    %1025 = vmatprep.subr.mxu0 0.0
    %1026 = vmatpush1.msra.mxu0 %v991
    %1027 = vmatprep.subr.mxu0 0.0
    %1028 = vmatpush1.msra.mxu0 %v990
    %1029 = vmatprep.subr.mxu0 0.0
    %1030 = vmatpush1.msra.mxu0 %v989
    %1031 = vmatprep.subr.mxu0 0.0
    %1032 = vmatpush2.msra.mxu0 0.0
    %1033 = vmatprep.subr.mxu0 0.0
    %1034 = vmatpush2.msra.mxu0 0.0
    %1035 = vmatprep.subr.mxu0 0.0
    %1036 = vmatpush2.msra.mxu0 0.0
    %1037 = vmatprep.subr.mxu0 0.0
    %1038 = vmatpush2.msra.mxu0 0.0
    %1039 = vmatprep.subr.mxu0 0.0
    %1040 = vmatpush2.msra.mxu0 0.0
    %1041 = vmatprep.subr.mxu0 0.0
    %1042 = vmatpush2.msra.mxu0 0.0
    %1043 = vmatprep.subr.mxu0 0.0
    %1044 = vmatpush2.msra.mxu0 0.0
    %1045 = vmatprep.subr.mxu0 0.0
    %1046 = vmatpush2.msra.mxu0 0.0
    %1047 = vmatprep.subr.mxu0 0.0
    %1048 = vmatpush2.msra.mxu0 0.0
    %1049 = vmatprep.subr.mxu0 0.0
    %1050 = vmatpush2.msra.mxu0 0.0
    %1051 = vmatprep.subr.mxu0 0.0
    %1052 = vmatpush2.msra.mxu0 0.0
    %1053 = vmatprep.subr.mxu0 0.0
    %1054 = vmatpush2.msra.mxu0 0.0
    %1055 = vmatprep.subr.mxu0 0.0
    %1056 = vmatpush2.msra.mxu0 0.0
    %1057 = vmatprep.subr.mxu0 0.0
    %1058 = vmatpush2.msra.mxu0 0.0
    %1059 = vmatprep.subr.mxu0 0.0
    %1060 = vmatpush2.msra.mxu0 0.0
    %1061 = vmatprep.subr.mxu0 0.0
    %1062 = vmatpush2.msra.mxu0 0.0
    %1063 = vmatprep.mubr.f32.mxu0 0.0
    %1064 = vmatmul.mubr.f32.gmra.mxu0 %v994
    %v1065 = vpop.f32.mrf.mxu0
    %v1066 = vadd.f32 0.0, %v1065
    %v1067 = vpop.f32.mrf.mxu0
    %1068 = vmatprep.mubr.f32.mxu0 0.0
    %1069 = vmatmul.mubr.f32.gmra.mxu0 %v997
    %v1070 = vpop.f32.mrf.mxu0
    %v1071 = vadd.f32 0.0, %v1070
    %v1072 = vpop.f32.mrf.mxu0
    %1073 = vdwg.mxu0
    %v1075 = vsel %vm363, %v890, 0
    %v1078 = vsel %vm363, %v891, 0
    %1080 = vmatprep.subr.mxu0 0.0
    %1081 = vmatpush1.msra.mxu0 0.0
    %1082 = vmatprep.subr.mxu0 0.0
    %1083 = vmatpush1.msra.mxu0 0.0
    %1084 = vmatprep.subr.mxu0 0.0
    %1085 = vmatpush1.msra.mxu0 0.0
    %1086 = vmatprep.subr.mxu0 0.0
    %1087 = vmatpush1.msra.mxu0 0.0
    %1088 = vmatprep.subr.mxu0 0.0
    %1089 = vmatpush1.msra.mxu0 0.0
    %1090 = vmatprep.subr.mxu0 0.0
    %1091 = vmatpush1.msra.mxu0 0.0
    %1092 = vmatprep.subr.mxu0 0.0
    %1093 = vmatpush1.msra.mxu0 0.0
    %1094 = vmatprep.subr.mxu0 0.0
    %1095 = vmatpush1.msra.mxu0 0.0
    %1096 = vmatprep.subr.mxu0 0.0
    %1097 = vmatpush1.msra.mxu0 0.0
    %1098 = vmatprep.subr.mxu0 0.0
    %1099 = vmatpush1.msra.mxu0 0.0
    %1100 = vmatprep.subr.mxu0 0.0
    %1101 = vmatpush1.msra.mxu0 0.0
    %1102 = vmatprep.subr.mxu0 0.0
    %1103 = vmatpush1.msra.mxu0 0.0
    %1104 = vmatprep.subr.mxu0 0.0
    %1105 = vmatpush1.msra.mxu0 %v987
    %1106 = vmatprep.subr.mxu0 0.0
    %1107 = vmatpush1.msra.mxu0 %v986
    %1108 = vmatprep.subr.mxu0 0.0
    %1109 = vmatpush1.msra.mxu0 %v985
    %1110 = vmatprep.subr.mxu0 0.0
    %1111 = vmatpush1.msra.mxu0 %v984
    %1112 = vmatprep.subr.mxu0 0.0
    %1113 = vmatpush2.msra.mxu0 0.0
    %1114 = vmatprep.subr.mxu0 0.0
    %1115 = vmatpush2.msra.mxu0 0.0
    %1116 = vmatprep.subr.mxu0 0.0
    %1117 = vmatpush2.msra.mxu0 0.0
    %1118 = vmatprep.subr.mxu0 0.0
    %1119 = vmatpush2.msra.mxu0 0.0
    %1120 = vmatprep.subr.mxu0 0.0
    %1121 = vmatpush2.msra.mxu0 0.0
    %1122 = vmatprep.subr.mxu0 0.0
    %1123 = vmatpush2.msra.mxu0 0.0
    %1124 = vmatprep.subr.mxu0 0.0
    %1125 = vmatpush2.msra.mxu0 0.0
    %1126 = vmatprep.subr.mxu0 0.0
    %1127 = vmatpush2.msra.mxu0 0.0
    %1128 = vmatprep.subr.mxu0 0.0
    %1129 = vmatpush2.msra.mxu0 0.0
    %1130 = vmatprep.subr.mxu0 0.0
    %1131 = vmatpush2.msra.mxu0 0.0
    %1132 = vmatprep.subr.mxu0 0.0
    %1133 = vmatpush2.msra.mxu0 0.0
    %1134 = vmatprep.subr.mxu0 0.0
    %1135 = vmatpush2.msra.mxu0 0.0
    %1136 = vmatprep.subr.mxu0 0.0
    %1137 = vmatpush2.msra.mxu0 0.0
    %1138 = vmatprep.subr.mxu0 0.0
    %1139 = vmatpush2.msra.mxu0 0.0
    %1140 = vmatprep.subr.mxu0 0.0
    %1141 = vmatpush2.msra.mxu0 0.0
    %1142 = vmatprep.subr.mxu0 0.0
    %1143 = vmatpush2.msra.mxu0 0.0
    %1144 = vmatprep.mubr.f32.mxu0 0.0
    %1145 = vmatmul.mubr.f32.gmra.mxu0 %v1075
    %v1146 = vpop.f32.mrf.mxu0
    %v1147 = vadd.f32 %v1066, %v1146
    %v1148 = vpop.f32.mrf.mxu0
    %1149 = vmatprep.mubr.f32.mxu0 0.0
    %1150 = vmatmul.mubr.f32.gmra.mxu0 %v1078
    %v1151 = vpop.f32.mrf.mxu0
    %v1152 = vadd.f32 %v1071, %v1151
    %v1153 = vpop.f32.mrf.mxu0
    %1154 = vdwg.mxu0
    %v1155 = vlaneseq
    %v1156 = vshrl.u32 %v1155, 7
    %v1157 = vsub.s32 2, %v1156
    %v1158 = vrot.slane %v269, %v1157
    %v1159 = vadd.f32 %v1147, %v1158
    %v1160 = vadd.f32 %v1152, %v1158
    %vm1161 = vcmp.ge.f32.partialorder %v1159, 0.0
    %vm1162 = vcmp.ge.f32.partialorder %v1160, 0.0
    %v1163 = vlaneseq
    %v1164 = vshrl.u32 %v1163, 7
    %v1165 = vsub.s32 2, %v1164
    %v1166 = vrot.slane %v270, %v1165
    %v1167 = vmul.f32 %v1166, %v1159
    %v1168 = vmul.f32 %v1166, %v1160
    %v1169 = vsel %vm1161, %v1159, %v1167
    %v1170 = vsel %vm1162, %v1160, %v1168
    %v1171 = vsel %vm363, %v1169, 0.0
    %1172 = vadd.xlane.f32.xlu0 %v1171
    %v1173 = vpop.xlane.xlu0 %1172
    %v1174 = vsel %vm363, %v1170, 0.0
    %1175 = vadd.xlane.f32.xlu0 %v1174
    %v1176 = vpop.xlane.xlu0 %1175
    %v1177 = vmul.f32 %v1173, %v548
    %v1178 = vmul.f32 %v1176, %v548
    %v1179 = vsub.f32 %v1169, %v1177
    %v1180 = vsub.f32 %v1170, %v1178
    %v1181 = vmul.f32 %v1179, %v1179
    %v1182 = vmul.f32 %v1180, %v1180
    %v1183 = vsel %vm363, %v1181, 0.0
    %1184 = vadd.xlane.f32.xlu0 %v1183
    %v1185 = vpop.xlane.xlu0 %1184
    %v1186 = vsel %vm363, %v1182, 0.0
    %1187 = vadd.xlane.f32.xlu0 %v1186
    %v1188 = vpop.xlane.xlu0 %1187
    %v1189 = vmul.f32 %v1185, %v548
    %v1190 = vmul.f32 %v1188, %v548
    %v1191 = vadd.f32 %v1189, 1e-05
    %v1192 = vadd.f32 %v1190, 1e-05
    %v1193 = vrsqrt.pop %v1191
    %v1194 = vrsqrt.pop %v1192
    %v1195 = vmul.f32 %v1179, %v1193
    %v1196 = vmul.f32 %v1180, %v1194
    %v1197 = vlaneseq
    %v1198 = vshrl.u32 %v1197, 7
    %v1199 = vsub.s32 2, %v1198
    %v1200 = vrot.slane %v271, %v1199
    %v1201 = vmul.f32 %v1195, %v1200
    %v1202 = vmul.f32 %v1196, %v1200
    %v1203 = vlaneseq
    %v1204 = vshrl.u32 %v1203, 7
    %v1205 = vsub.s32 2, %v1204
    %v1206 = vrot.slane %v272, %v1205
    %v1207 = vadd.f32 %v1201, %v1206
    %v1208 = vadd.f32 %v1202, %v1206
    %v1209 = vsel %vm363, %v1207, 0.0
    %v1210 = vsel %vm363, %v1208, 0.0
    %v1211 = vadd.f32 %v1209, %v1210
    %v1212 = vrot.slane %v1211, 4
    %v1213 = vadd.f32 %v1211, %v1212
    %v1214 = vrot.slane %v1213, 2
    %v1215 = vadd.f32 %v1213, %v1214
    %v1216 = vrot.slane %v1215, 1
    %v1217 = vadd.f32 %v1215, %v1216
    %v1218 = vmul.f32 %v1217, 0.0625
    %1220 = vrot.lane.b32.xlu0 %v1218, 64
    %v1221 = vpop.permute.xlu0 %1220
    %vm1223 = vcmask 778752
    %1224 = vst.msk [vmem:[#allocation2] sm:$0x1] %vm1223, %v1221
    %1225 = vmatprep.subr.mxu0 0.0
    %1226 = vmatpush1.msra.mxu0 0.0
    %1227 = vmatprep.subr.mxu0 0.0
    %1228 = vmatpush1.msra.mxu0 0.0
    %1229 = vmatprep.subr.mxu0 0.0
    %1230 = vmatpush1.msra.mxu0 0.0
    %1231 = vmatprep.subr.mxu0 0.0
    %1232 = vmatpush1.msra.mxu0 0.0
    %1233 = vmatprep.subr.mxu0 0.0
    %1234 = vmatpush1.msra.mxu0 0.0
    %1235 = vmatprep.subr.mxu0 0.0
    %1236 = vmatpush1.msra.mxu0 0.0
    %1237 = vmatprep.subr.mxu0 0.0
    %1238 = vmatpush1.msra.mxu0 0.0
    %1239 = vmatprep.subr.mxu0 0.0
    %1240 = vmatpush1.msra.mxu0 0.0
    %1241 = vmatprep.subr.mxu0 0.0
    %1242 = vmatpush1.msra.mxu0 0.0
    %1243 = vmatprep.subr.mxu0 0.0
    %1244 = vmatpush1.msra.mxu0 0.0
    %1245 = vmatprep.subr.mxu0 0.0
    %1246 = vmatpush1.msra.mxu0 0.0
    %1247 = vmatprep.subr.mxu0 0.0
    %1248 = vmatpush1.msra.mxu0 0.0
    %1249 = vmatprep.subr.mxu0 0.0
    %1250 = vmatpush1.msra.mxu0 0.0
    %1251 = vmatprep.subr.mxu0 0.0
    %1252 = vmatpush1.msra.mxu0 0.0
    %1253 = vmatprep.subr.mxu0 0.0
    %1254 = vmatpush1.msra.mxu0 %v1208
    %1255 = vmatprep.subr.mxu0 0.0
    %1256 = vmatpush1.msra.mxu0 %v1207
    %1257 = vmatprep.subr.mxu0 0.0
    %1258 = vmatpush2.msra.mxu0 0.0
    %1259 = vmatprep.subr.mxu0 0.0
    %1260 = vmatpush2.msra.mxu0 0.0
    %1261 = vmatprep.subr.mxu0 0.0
    %1262 = vmatpush2.msra.mxu0 0.0
    %1263 = vmatprep.subr.mxu0 0.0
    %1264 = vmatpush2.msra.mxu0 0.0
    %1265 = vmatprep.subr.mxu0 0.0
    %1266 = vmatpush2.msra.mxu0 0.0
    %1267 = vmatprep.subr.mxu0 0.0
    %1268 = vmatpush2.msra.mxu0 0.0
    %1269 = vmatprep.subr.mxu0 0.0
    %1270 = vmatpush2.msra.mxu0 0.0
    %1271 = vmatprep.subr.mxu0 0.0
    %1272 = vmatpush2.msra.mxu0 0.0
    %1273 = vmatprep.subr.mxu0 0.0
    %1274 = vmatpush2.msra.mxu0 0.0
    %1275 = vmatprep.subr.mxu0 0.0
    %1276 = vmatpush2.msra.mxu0 0.0
    %1277 = vmatprep.subr.mxu0 0.0
    %1278 = vmatpush2.msra.mxu0 0.0
    %1279 = vmatprep.subr.mxu0 0.0
    %1280 = vmatpush2.msra.mxu0 0.0
    %1281 = vmatprep.subr.mxu0 0.0
    %1282 = vmatpush2.msra.mxu0 0.0
    %1283 = vmatprep.subr.mxu0 0.0
    %1284 = vmatpush2.msra.mxu0 0.0
    %1285 = vmatprep.subr.mxu0 0.0
    %1286 = vmatpush2.msra.mxu0 0.0
    %1287 = vmatprep.subr.mxu0 0.0
    %1288 = vmatpush2.msra.mxu0 0.0
    %1289 = vmatprep.mubr.f32.mxu0 0.0
    %1290 = vmatmul.mubr.f32.gmra.mxu0 %v275
    %v1291 = vpop.f32.mrf.mxu0
    %v1292 = vadd.f32 0.0, %v1291
    %v1293 = vpop.f32.mrf.mxu0
    %1294 = vmatprep.mubr.f32.mxu0 0.0
    %1295 = vmatmul.mubr.f32.gmra.mxu0 %v278
    %v1296 = vpop.f32.mrf.mxu0
    %v1297 = vadd.f32 0.0, %v1296
    %v1298 = vpop.f32.mrf.mxu0
    %1299 = vdwg.mxu0
    %s1300 = scalar_lea.vmem %s5, 64
    %v1301 = vld [vmem:[%s1300] sm:$0xff]
    %v1302 = vld [vmem:[%s1300 + $0x8] sm:$0xff]
    %v1303 = vld [vmem:[%s1300 + $0x10] sm:$0xff]
    %v1304 = vld [vmem:[%s1300 + $0x18] sm:$0xff]
    %s1305 = scalar_lea.vmem %s6, 64
    %v1306 = vld [vmem:[%s1305] sm:$0xff]
    %v1307 = vld [vmem:[%s1305 + $0x8] sm:$0xff]
    %v1308 = vld [vmem:[%s1305 + $0x10] sm:$0xff]
    %v1309 = vld [vmem:[%s1305 + $0x18] sm:$0xff]
    %v1311 = vsel %vm363, %v1292, 0
    %v1314 = vsel %vm363, %v1297, 0
    %1316 = vmatprep.subr.mxu0 0.0
    %1317 = vmatpush1.msra.mxu0 0.0
    %1318 = vmatprep.subr.mxu0 0.0
    %1319 = vmatpush1.msra.mxu0 0.0
    %1320 = vmatprep.subr.mxu0 0.0
    %1321 = vmatpush1.msra.mxu0 0.0
    %1322 = vmatprep.subr.mxu0 0.0
    %1323 = vmatpush1.msra.mxu0 0.0
    %1324 = vmatprep.subr.mxu0 0.0
    %1325 = vmatpush1.msra.mxu0 0.0
    %1326 = vmatprep.subr.mxu0 0.0
    %1327 = vmatpush1.msra.mxu0 0.0
    %1328 = vmatprep.subr.mxu0 0.0
    %1329 = vmatpush1.msra.mxu0 0.0
    %1330 = vmatprep.subr.mxu0 0.0
    %1331 = vmatpush1.msra.mxu0 0.0
    %1332 = vmatprep.subr.mxu0 0.0
    %1333 = vmatpush1.msra.mxu0 0.0
    %1334 = vmatprep.subr.mxu0 0.0
    %1335 = vmatpush1.msra.mxu0 0.0
    %1336 = vmatprep.subr.mxu0 0.0
    %1337 = vmatpush1.msra.mxu0 0.0
    %1338 = vmatprep.subr.mxu0 0.0
    %1339 = vmatpush1.msra.mxu0 0.0
    %1340 = vmatprep.subr.mxu0 0.0
    %1341 = vmatpush1.msra.mxu0 %v1309
    %1342 = vmatprep.subr.mxu0 0.0
    %1343 = vmatpush1.msra.mxu0 %v1308
    %1344 = vmatprep.subr.mxu0 0.0
    %1345 = vmatpush1.msra.mxu0 %v1307
    %1346 = vmatprep.subr.mxu0 0.0
    %1347 = vmatpush1.msra.mxu0 %v1306
    %1348 = vmatprep.subr.mxu0 0.0
    %1349 = vmatpush2.msra.mxu0 0.0
    %1350 = vmatprep.subr.mxu0 0.0
    %1351 = vmatpush2.msra.mxu0 0.0
    %1352 = vmatprep.subr.mxu0 0.0
    %1353 = vmatpush2.msra.mxu0 0.0
    %1354 = vmatprep.subr.mxu0 0.0
    %1355 = vmatpush2.msra.mxu0 0.0
    %1356 = vmatprep.subr.mxu0 0.0
    %1357 = vmatpush2.msra.mxu0 0.0
    %1358 = vmatprep.subr.mxu0 0.0
    %1359 = vmatpush2.msra.mxu0 0.0
    %1360 = vmatprep.subr.mxu0 0.0
    %1361 = vmatpush2.msra.mxu0 0.0
    %1362 = vmatprep.subr.mxu0 0.0
    %1363 = vmatpush2.msra.mxu0 0.0
    %1364 = vmatprep.subr.mxu0 0.0
    %1365 = vmatpush2.msra.mxu0 0.0
    %1366 = vmatprep.subr.mxu0 0.0
    %1367 = vmatpush2.msra.mxu0 0.0
    %1368 = vmatprep.subr.mxu0 0.0
    %1369 = vmatpush2.msra.mxu0 0.0
    %1370 = vmatprep.subr.mxu0 0.0
    %1371 = vmatpush2.msra.mxu0 0.0
    %1372 = vmatprep.subr.mxu0 0.0
    %1373 = vmatpush2.msra.mxu0 0.0
    %1374 = vmatprep.subr.mxu0 0.0
    %1375 = vmatpush2.msra.mxu0 0.0
    %1376 = vmatprep.subr.mxu0 0.0
    %1377 = vmatpush2.msra.mxu0 0.0
    %1378 = vmatprep.subr.mxu0 0.0
    %1379 = vmatpush2.msra.mxu0 0.0
    %1380 = vmatprep.mubr.f32.mxu0 0.0
    %1381 = vmatmul.mubr.f32.gmra.mxu0 %v1311
    %v1382 = vpop.f32.mrf.mxu0
    %v1383 = vadd.f32 0.0, %v1382
    %v1384 = vpop.f32.mrf.mxu0
    %1385 = vmatprep.mubr.f32.mxu0 0.0
    %1386 = vmatmul.mubr.f32.gmra.mxu0 %v1314
    %v1387 = vpop.f32.mrf.mxu0
    %v1388 = vadd.f32 0.0, %v1387
    %v1389 = vpop.f32.mrf.mxu0
    %1390 = vdwg.mxu0
    %v1392 = vsel %vm363, %v1207, 0
    %v1395 = vsel %vm363, %v1208, 0
    %1397 = vmatprep.subr.mxu0 0.0
    %1398 = vmatpush1.msra.mxu0 0.0
    %1399 = vmatprep.subr.mxu0 0.0
    %1400 = vmatpush1.msra.mxu0 0.0
    %1401 = vmatprep.subr.mxu0 0.0
    %1402 = vmatpush1.msra.mxu0 0.0
    %1403 = vmatprep.subr.mxu0 0.0
    %1404 = vmatpush1.msra.mxu0 0.0
    %1405 = vmatprep.subr.mxu0 0.0
    %1406 = vmatpush1.msra.mxu0 0.0
    %1407 = vmatprep.subr.mxu0 0.0
    %1408 = vmatpush1.msra.mxu0 0.0
    %1409 = vmatprep.subr.mxu0 0.0
    %1410 = vmatpush1.msra.mxu0 0.0
    %1411 = vmatprep.subr.mxu0 0.0
    %1412 = vmatpush1.msra.mxu0 0.0
    %1413 = vmatprep.subr.mxu0 0.0
    %1414 = vmatpush1.msra.mxu0 0.0
    %1415 = vmatprep.subr.mxu0 0.0
    %1416 = vmatpush1.msra.mxu0 0.0
    %1417 = vmatprep.subr.mxu0 0.0
    %1418 = vmatpush1.msra.mxu0 0.0
    %1419 = vmatprep.subr.mxu0 0.0
    %1420 = vmatpush1.msra.mxu0 0.0
    %1421 = vmatprep.subr.mxu0 0.0
    %1422 = vmatpush1.msra.mxu0 %v1304
    %1423 = vmatprep.subr.mxu0 0.0
    %1424 = vmatpush1.msra.mxu0 %v1303
    %1425 = vmatprep.subr.mxu0 0.0
    %1426 = vmatpush1.msra.mxu0 %v1302
    %1427 = vmatprep.subr.mxu0 0.0
    %1428 = vmatpush1.msra.mxu0 %v1301
    %1429 = vmatprep.subr.mxu0 0.0
    %1430 = vmatpush2.msra.mxu0 0.0
    %1431 = vmatprep.subr.mxu0 0.0
    %1432 = vmatpush2.msra.mxu0 0.0
    %1433 = vmatprep.subr.mxu0 0.0
    %1434 = vmatpush2.msra.mxu0 0.0
    %1435 = vmatprep.subr.mxu0 0.0
    %1436 = vmatpush2.msra.mxu0 0.0
    %1437 = vmatprep.subr.mxu0 0.0
    %1438 = vmatpush2.msra.mxu0 0.0
    %1439 = vmatprep.subr.mxu0 0.0
    %1440 = vmatpush2.msra.mxu0 0.0
    %1441 = vmatprep.subr.mxu0 0.0
    %1442 = vmatpush2.msra.mxu0 0.0
    %1443 = vmatprep.subr.mxu0 0.0
    %1444 = vmatpush2.msra.mxu0 0.0
    %1445 = vmatprep.subr.mxu0 0.0
    %1446 = vmatpush2.msra.mxu0 0.0
    %1447 = vmatprep.subr.mxu0 0.0
    %1448 = vmatpush2.msra.mxu0 0.0
    %1449 = vmatprep.subr.mxu0 0.0
    %1450 = vmatpush2.msra.mxu0 0.0
    %1451 = vmatprep.subr.mxu0 0.0
    %1452 = vmatpush2.msra.mxu0 0.0
    %1453 = vmatprep.subr.mxu0 0.0
    %1454 = vmatpush2.msra.mxu0 0.0
    %1455 = vmatprep.subr.mxu0 0.0
    %1456 = vmatpush2.msra.mxu0 0.0
    %1457 = vmatprep.subr.mxu0 0.0
    %1458 = vmatpush2.msra.mxu0 0.0
    %1459 = vmatprep.subr.mxu0 0.0
    %1460 = vmatpush2.msra.mxu0 0.0
    %1461 = vmatprep.mubr.f32.mxu0 0.0
    %1462 = vmatmul.mubr.f32.gmra.mxu0 %v1392
    %v1463 = vpop.f32.mrf.mxu0
    %v1464 = vadd.f32 %v1383, %v1463
    %v1465 = vpop.f32.mrf.mxu0
    %1466 = vmatprep.mubr.f32.mxu0 0.0
    %1467 = vmatmul.mubr.f32.gmra.mxu0 %v1395
    %v1468 = vpop.f32.mrf.mxu0
    %v1469 = vadd.f32 %v1388, %v1468
    %v1470 = vpop.f32.mrf.mxu0
    %1471 = vdwg.mxu0
    %v1472 = vlaneseq
    %v1473 = vshrl.u32 %v1472, 7
    %v1474 = vsub.s32 3, %v1473
    %v1475 = vrot.slane %v269, %v1474
    %v1476 = vadd.f32 %v1464, %v1475
    %v1477 = vadd.f32 %v1469, %v1475
    %vm1478 = vcmp.ge.f32.partialorder %v1476, 0.0
    %vm1479 = vcmp.ge.f32.partialorder %v1477, 0.0
    %v1480 = vlaneseq
    %v1481 = vshrl.u32 %v1480, 7
    %v1482 = vsub.s32 3, %v1481
    %v1483 = vrot.slane %v270, %v1482
    %v1484 = vmul.f32 %v1483, %v1476
    %v1485 = vmul.f32 %v1483, %v1477
    %v1486 = vsel %vm1478, %v1476, %v1484
    %v1487 = vsel %vm1479, %v1477, %v1485
    %v1488 = vsel %vm363, %v1486, 0.0
    %1489 = vadd.xlane.f32.xlu0 %v1488
    %v1490 = vpop.xlane.xlu0 %1489
    %v1491 = vsel %vm363, %v1487, 0.0
    %1492 = vadd.xlane.f32.xlu0 %v1491
    %v1493 = vpop.xlane.xlu0 %1492
    %v1494 = vmul.f32 %v1490, %v548
    %v1495 = vmul.f32 %v1493, %v548
    %v1496 = vsub.f32 %v1486, %v1494
    %v1497 = vsub.f32 %v1487, %v1495
    %v1498 = vmul.f32 %v1496, %v1496
    %v1499 = vmul.f32 %v1497, %v1497
    %v1500 = vsel %vm363, %v1498, 0.0
    %1501 = vadd.xlane.f32.xlu0 %v1500
    %v1502 = vpop.xlane.xlu0 %1501
    %v1503 = vsel %vm363, %v1499, 0.0
    %1504 = vadd.xlane.f32.xlu0 %v1503
    %v1505 = vpop.xlane.xlu0 %1504
    %v1506 = vmul.f32 %v1502, %v548
    %v1507 = vmul.f32 %v1505, %v548
    %v1508 = vadd.f32 %v1506, 1e-05
    %v1509 = vadd.f32 %v1507, 1e-05
    %v1510 = vrsqrt.pop %v1508
    %v1511 = vrsqrt.pop %v1509
    %v1512 = vmul.f32 %v1496, %v1510
    %v1513 = vmul.f32 %v1497, %v1511
    %v1514 = vlaneseq
    %v1515 = vshrl.u32 %v1514, 7
    %v1516 = vsub.s32 3, %v1515
    %v1517 = vrot.slane %v271, %v1516
    %v1518 = vmul.f32 %v1512, %v1517
    %v1519 = vmul.f32 %v1513, %v1517
    %v1520 = vlaneseq
    %v1521 = vshrl.u32 %v1520, 7
    %v1522 = vsub.s32 3, %v1521
    %v1523 = vrot.slane %v272, %v1522
    %v1524 = vadd.f32 %v1518, %v1523
    %v1525 = vadd.f32 %v1519, %v1523
    %v1526 = vsel %vm363, %v1524, 0.0
    %v1527 = vsel %vm363, %v1525, 0.0
    %v1528 = vadd.f32 %v1526, %v1527
    %v1529 = vrot.slane %v1528, 4
    %v1530 = vadd.f32 %v1528, %v1529
    %v1531 = vrot.slane %v1530, 2
    %v1532 = vadd.f32 %v1530, %v1531
    %v1533 = vrot.slane %v1532, 1
    %v1534 = vadd.f32 %v1532, %v1533
    %v1535 = vmul.f32 %v1534, 0.0625
    %1537 = vrot.lane.b32.xlu0 %v1535, 96
    %v1538 = vpop.permute.xlu0 %1537
    %vm1540 = vcmask 1041152
    %1541 = vst.msk [vmem:[#allocation2] sm:$0x1] %vm1540, %v1538
    // Predicated region
    $region46: #{gcn_forward.1} parent=1 // pred_check
      _
    $region47: #{gcn_forward.1} parent=1 // pred_check_branch
      %1543 = sbr.rel (0) target = $region49
    $region48: #{gcn_forward.1} parent=1 // pred_region
      %s1545 = ssub.s32 16, 16
      %1546 = vsyncadd [#allocation3], %s1545
      %s1548 = sshll.u32 [#allocation2], 4
      %s1549 = int_to_ptr.vmem [resolvable:$true] %s1548
      %1551 = dma.vmem_to_hbm [thread:$0]  %s1549, 16, %s11, [#allocation3]
    $region49: #{gcn_forward.1} parent=1 // pred_fallthru
      _
    // Predicated region
    $region50: #{gcn_forward.1} parent=1 // pred_check
      _
    $region51: #{gcn_forward.1} parent=1 // pred_check_branch
      %1553 = sbr.rel (0) target = $region53
    $region52: #{gcn_forward.1} parent=1 // pred_region
      %1554 = dma.done [#allocation3], 16
    $region53: #{gcn_forward.1} parent=1 // pred_fallthru
      _
    %1555 = vsyncpa [#allocation3], 1

</llo_original>
